<compile_context>
chip_gen: v5e
topology: v5e:2x2
jax: 0.10.0
libtpu: 0.0.40
codegen_flags: <defaults>
</compile_context>

<pallas_src>
import functools

import numpy as np
import jax
import jax.numpy as jnp
from jax.experimental import pallas as pl
from jax.experimental.pallas import tpu as pltpu

_LANE = 128
_SUB = 8                          # max sublane rows of batch per grid step
_SQUARINGS = 5                    # exp(A) = exp(A / 2^S)^(2^S)
_TAYLOR_TERMS = 7                 # Horner Taylor degree for exp of the scaled A


def _mat9_mul(x, y):
    """3x3 matmul on row-major flattened matrices given as lists of 9 dense tiles."""
    z = []
    for i in range(3):
        for j in range(3):
            z.append(x[3 * i + 0] * y[0 + j]
                     + x[3 * i + 1] * y[3 + j]
                     + x[3 * i + 2] * y[6 + j])
    return z


def lie_homography_kernel(lie_ref, out_ref, *, weights):
    # lie_ref: (8, sub, LANE)  -- Lie parameter i for a (sub, LANE) batch tile
    # out_ref: (9, sub, LANE)  -- row-major flattened 3x3 homography entries
    w = weights
    l = [lie_ref[i] * jnp.float32(w[i]) for i in range(8)]

    # Sparse construction of A = sum_i l_i * elements_i (row-major flat 3x3).
    a = [
        l[3] + l[4],                # A[0,0] =  w3*l3 + w4*l4
        l[5] - l[2],                # A[0,1] = -w2*l2 + w5*l5
        l[0],                       # A[0,2] =  w0*l0
        l[2] + l[5],                # A[1,0] =  w2*l2 + w5*l5
        l[3] - l[4],                # A[1,1] =  w3*l3 - w4*l4
        l[1],                       # A[1,2] =  w1*l1
        l[6],                       # A[2,0] =  w6*l6
        l[7],                       # A[2,1] =  w7*l7
        jnp.float32(-2.0) * l[3],   # A[2,2] = -2*w3*l3
    ]

    # --- matrix exponential: scaling-and-squaring + Horner Taylor -----------
    scale = jnp.float32(1.0 / (2 ** _SQUARINGS))
    a = [ai * scale for ai in a]

    # Horner: exp(X) = I + X (I + X/2 (I + X/3 (... (I + X/K) ...)))
    # First step folded (X @ I == X); identity added only on diagonal entries.
    inv_k = jnp.float32(1.0 / _TAYLOR_TERMS)
    e = [ai * inv_k for ai in a]
    e[0] = e[0] + 1.0
    e[4] = e[4] + 1.0
    e[8] = e[8] + 1.0
    for k in range(_TAYLOR_TERMS - 1, 0, -1):
        z = _mat9_mul(a, e)
        inv_k = jnp.float32(1.0 / k)
        e = [zi * inv_k for zi in z]
        e[0] = e[0] + 1.0
        e[4] = e[4] + 1.0
        e[8] = e[8] + 1.0

    for _ in range(_SQUARINGS):
        e = _mat9_mul(e, e)

    # Projective normalization by H[2,2]: approx reciprocal on the EUP slot,
    # plus one Newton refinement step, applied to all 9 entries.
    denom = e[8]
    inv = pl.reciprocal(denom, approx=True)
    inv = inv * (jnp.float32(2.0) - denom * inv)
    for m in range(9):
        out_ref[m] = (e[m] * inv).astype(out_ref.dtype)


def lie_homography(lie_vectors: jnp.ndarray, weights) -> jnp.ndarray:
    """lie_vectors: (B, 8) float -> (B, 3, 3) float32 homographies."""
    b = lie_vectors.shape[0]

    # Pad batch to a lane multiple; only pad to a full (8 x 128) super-tile when
    # the batch needs more than one grid step.
    b_pad = ((b + _LANE - 1) // _LANE) * _LANE
    r = b_pad // _LANE
    if r <= _SUB:
        sub = r
        grid = (1,)
    else:
        r = ((r + _SUB - 1) // _SUB) * _SUB
        b_pad = r * _LANE
        sub = _SUB
        grid = (r // _SUB,)

    lie_t = jnp.transpose(lie_vectors.astype(jnp.float32))          # (8, B)
    lie_t = jnp.pad(lie_t, ((0, 0), (0, b_pad - b)))                 # zeros -> exp(0)=I
    lie_3d = lie_t.reshape(8, r, _LANE)                              # (8, R, 128)

    kernel = functools.partial(
        lie_homography_kernel,
        weights=tuple(float(x) for x in np.asarray(weights).reshape(8)),
    )
    out = pl.pallas_call(
        kernel,
        out_shape=jax.ShapeDtypeStruct((9, r, _LANE), jnp.float32),
        grid=grid,
        in_specs=[pl.BlockSpec((8, sub, _LANE), lambda i: (0, i, 0))],
        out_specs=pl.BlockSpec((9, sub, _LANE), lambda i: (0, i, 0)),
        compiler_params=pltpu.CompilerParams(
            dimension_semantics=("parallel",),
            vmem_limit_bytes=32 * 1024 * 1024,
        ),
    )(lie_3d)

    out_flat = out.reshape(9, b_pad).T[:b]                           # (B, 9)
    return out_flat.reshape(b, 3, 3)


def _make_generators(weights: np.ndarray) -> np.ndarray:
    """weights[i] * elements[i] as an (8, 3, 3) array (reference only)."""
    elements = np.zeros((8, 3, 3), dtype=np.float32)
    elements[0, 0, 2] = 1.0
    elements[1, 1, 2] = 1.0
    elements[2, 0, 1] = -1.0
    elements[2, 1, 0] = 1.0
    elements[3, 0, 0] = 1.0
    elements[3, 1, 1] = 1.0
    elements[3, 2, 2] = -2.0
    elements[4, 0, 0] = 1.0
    elements[4, 1, 1] = -1.0
    elements[5, 0, 1] = 1.0
    elements[5, 1, 0] = 1.0
    elements[6, 2, 0] = 1.0
    elements[7, 2, 1] = 1.0
    return elements * np.asarray(weights, dtype=np.float32)[:, None, None]


if __name__ == "__main__":
    key = jax.random.PRNGKey(0)
    B = 8

    # All constructor weights default to 1.0.
    weights = np.ones((8,), dtype=np.float32)

    # Keep Lie parameters moderate (as a real optimizer would).
    lie_vectors = 0.5 * jax.random.normal(key, (B, 8), dtype=jnp.float32)

    homographies = jax.block_until_ready(lie_homography(lie_vectors, weights))

    # --- reference check in plain JAX (float32; TPU has no f64) -------------
    gen = jnp.asarray(_make_generators(weights))                     # (8, 3, 3)
    a_ref = jnp.einsum("bi,ijk->bjk", lie_vectors, gen)
    h_ref = jax.vmap(jax.scipy.linalg.expm)(a_ref)
    h_ref = h_ref / h_ref[:, 2:3, 2:3]

    assert homographies.shape == (B, 3, 3)
    assert homographies.dtype == jnp.float32
    assert bool(jnp.all(jnp.isfinite(homographies)))
    err = float(jnp.max(jnp.abs(homographies - h_ref)))
    assert err < 2e-2, f"max abs error vs expm reference: {err}"

    print("KERNEL_OK")
</pallas_src>

<mosaic_0001>
module attributes {stable_mosaic.version = 11 : i64} {
  func.func @lie_homography_kernel(%arg0: i32, %arg1: memref<8x1x128xf32, #tpu.memory_space<vmem>>, %arg2: memref<9x1x128xf32, #tpu.memory_space<vmem>>) attributes {dimension_semantics = [#tpu.dimension_semantics<parallel>], iteration_bounds = array<i64: 1>, scalar_prefetch = 0 : i64, scratch_operands = 0 : i64, tpu.core_type = #tpu.core_type<tc>, window_params = [{transform_indices = @transform_0, window_bounds = array<i64: 8, 1, 128>}, {transform_indices = @transform_1, window_bounds = array<i64: 9, 1, 128>}]} {
    %c0 = arith.constant 0 : index
    %c0_0 = arith.constant 0 : index
    %c0_1 = arith.constant 0 : index
    %0 = vector.load %arg1[%c0, %c0_0, %c0_1] : memref<8x1x128xf32, #tpu.memory_space<vmem>>, vector<1x1x128xf32>
    %1 = vector.shape_cast %0 : vector<1x1x128xf32> to vector<1x128xf32>
    %cst = arith.constant 1.000000e+00 : f32
    %2 = vector.broadcast %cst : f32 to vector<1x128xf32>
    %3 = arith.mulf %1, %2 : vector<1x128xf32>
    %c1 = arith.constant 1 : index
    %c0_2 = arith.constant 0 : index
    %c0_3 = arith.constant 0 : index
    %4 = vector.load %arg1[%c1, %c0_2, %c0_3] : memref<8x1x128xf32, #tpu.memory_space<vmem>>, vector<1x1x128xf32>
    %5 = vector.shape_cast %4 : vector<1x1x128xf32> to vector<1x128xf32>
    %cst_4 = arith.constant 1.000000e+00 : f32
    %6 = vector.broadcast %cst_4 : f32 to vector<1x128xf32>
    %7 = arith.mulf %5, %6 : vector<1x128xf32>
    %c2 = arith.constant 2 : index
    %c0_5 = arith.constant 0 : index
    %c0_6 = arith.constant 0 : index
    %8 = vector.load %arg1[%c2, %c0_5, %c0_6] : memref<8x1x128xf32, #tpu.memory_space<vmem>>, vector<1x1x128xf32>
    %9 = vector.shape_cast %8 : vector<1x1x128xf32> to vector<1x128xf32>
    %cst_7 = arith.constant 1.000000e+00 : f32
    %10 = vector.broadcast %cst_7 : f32 to vector<1x128xf32>
    %11 = arith.mulf %9, %10 : vector<1x128xf32>
    %c3 = arith.constant 3 : index
    %c0_8 = arith.constant 0 : index
    %c0_9 = arith.constant 0 : index
    %12 = vector.load %arg1[%c3, %c0_8, %c0_9] : memref<8x1x128xf32, #tpu.memory_space<vmem>>, vector<1x1x128xf32>
    %13 = vector.shape_cast %12 : vector<1x1x128xf32> to vector<1x128xf32>
    %cst_10 = arith.constant 1.000000e+00 : f32
    %14 = vector.broadcast %cst_10 : f32 to vector<1x128xf32>
    %15 = arith.mulf %13, %14 : vector<1x128xf32>
    %c4 = arith.constant 4 : index
    %c0_11 = arith.constant 0 : index
    %c0_12 = arith.constant 0 : index
    %16 = vector.load %arg1[%c4, %c0_11, %c0_12] : memref<8x1x128xf32, #tpu.memory_space<vmem>>, vector<1x1x128xf32>
    %17 = vector.shape_cast %16 : vector<1x1x128xf32> to vector<1x128xf32>
    %cst_13 = arith.constant 1.000000e+00 : f32
    %18 = vector.broadcast %cst_13 : f32 to vector<1x128xf32>
    %19 = arith.mulf %17, %18 : vector<1x128xf32>
    %c5 = arith.constant 5 : index
    %c0_14 = arith.constant 0 : index
    %c0_15 = arith.constant 0 : index
    %20 = vector.load %arg1[%c5, %c0_14, %c0_15] : memref<8x1x128xf32, #tpu.memory_space<vmem>>, vector<1x1x128xf32>
    %21 = vector.shape_cast %20 : vector<1x1x128xf32> to vector<1x128xf32>
    %cst_16 = arith.constant 1.000000e+00 : f32
    %22 = vector.broadcast %cst_16 : f32 to vector<1x128xf32>
    %23 = arith.mulf %21, %22 : vector<1x128xf32>
    %c6 = arith.constant 6 : index
    %c0_17 = arith.constant 0 : index
    %c0_18 = arith.constant 0 : index
    %24 = vector.load %arg1[%c6, %c0_17, %c0_18] : memref<8x1x128xf32, #tpu.memory_space<vmem>>, vector<1x1x128xf32>
    %25 = vector.shape_cast %24 : vector<1x1x128xf32> to vector<1x128xf32>
    %cst_19 = arith.constant 1.000000e+00 : f32
    %26 = vector.broadcast %cst_19 : f32 to vector<1x128xf32>
    %27 = arith.mulf %25, %26 : vector<1x128xf32>
    %c7 = arith.constant 7 : index
    %c0_20 = arith.constant 0 : index
    %c0_21 = arith.constant 0 : index
    %28 = vector.load %arg1[%c7, %c0_20, %c0_21] : memref<8x1x128xf32, #tpu.memory_space<vmem>>, vector<1x1x128xf32>
    %29 = vector.shape_cast %28 : vector<1x1x128xf32> to vector<1x128xf32>
    %cst_22 = arith.constant 1.000000e+00 : f32
    %30 = vector.broadcast %cst_22 : f32 to vector<1x128xf32>
    %31 = arith.mulf %29, %30 : vector<1x128xf32>
    %32 = arith.addf %15, %19 : vector<1x128xf32>
    %33 = arith.subf %23, %11 : vector<1x128xf32>
    %34 = arith.addf %11, %23 : vector<1x128xf32>
    %35 = arith.subf %15, %19 : vector<1x128xf32>
    %cst_23 = arith.constant -2.000000e+00 : f32
    %36 = vector.broadcast %cst_23 : f32 to vector<1x128xf32>
    %37 = arith.mulf %36, %15 : vector<1x128xf32>
    %cst_24 = arith.constant 3.125000e-02 : f32
    %38 = vector.broadcast %cst_24 : f32 to vector<1x128xf32>
    %39 = arith.mulf %32, %38 : vector<1x128xf32>
    %cst_25 = arith.constant 3.125000e-02 : f32
    %40 = vector.broadcast %cst_25 : f32 to vector<1x128xf32>
    %41 = arith.mulf %33, %40 : vector<1x128xf32>
    %cst_26 = arith.constant 3.125000e-02 : f32
    %42 = vector.broadcast %cst_26 : f32 to vector<1x128xf32>
    %43 = arith.mulf %3, %42 : vector<1x128xf32>
    %cst_27 = arith.constant 3.125000e-02 : f32
    %44 = vector.broadcast %cst_27 : f32 to vector<1x128xf32>
    %45 = arith.mulf %34, %44 : vector<1x128xf32>
    %cst_28 = arith.constant 3.125000e-02 : f32
    %46 = vector.broadcast %cst_28 : f32 to vector<1x128xf32>
    %47 = arith.mulf %35, %46 : vector<1x128xf32>
    %cst_29 = arith.constant 3.125000e-02 : f32
    %48 = vector.broadcast %cst_29 : f32 to vector<1x128xf32>
    %49 = arith.mulf %7, %48 : vector<1x128xf32>
    %cst_30 = arith.constant 3.125000e-02 : f32
    %50 = vector.broadcast %cst_30 : f32 to vector<1x128xf32>
    %51 = arith.mulf %27, %50 : vector<1x128xf32>
    %cst_31 = arith.constant 3.125000e-02 : f32
    %52 = vector.broadcast %cst_31 : f32 to vector<1x128xf32>
    %53 = arith.mulf %31, %52 : vector<1x128xf32>
    %cst_32 = arith.constant 3.125000e-02 : f32
    %54 = vector.broadcast %cst_32 : f32 to vector<1x128xf32>
    %55 = arith.mulf %37, %54 : vector<1x128xf32>
    %cst_33 = arith.constant 0.142857149 : f32
    %56 = vector.broadcast %cst_33 : f32 to vector<1x128xf32>
    %57 = arith.mulf %39, %56 : vector<1x128xf32>
    %cst_34 = arith.constant 0.142857149 : f32
    %58 = vector.broadcast %cst_34 : f32 to vector<1x128xf32>
    %59 = arith.mulf %41, %58 : vector<1x128xf32>
    %cst_35 = arith.constant 0.142857149 : f32
    %60 = vector.broadcast %cst_35 : f32 to vector<1x128xf32>
    %61 = arith.mulf %43, %60 : vector<1x128xf32>
    %cst_36 = arith.constant 0.142857149 : f32
    %62 = vector.broadcast %cst_36 : f32 to vector<1x128xf32>
    %63 = arith.mulf %45, %62 : vector<1x128xf32>
    %cst_37 = arith.constant 0.142857149 : f32
    %64 = vector.broadcast %cst_37 : f32 to vector<1x128xf32>
    %65 = arith.mulf %47, %64 : vector<1x128xf32>
    %cst_38 = arith.constant 0.142857149 : f32
    %66 = vector.broadcast %cst_38 : f32 to vector<1x128xf32>
    %67 = arith.mulf %49, %66 : vector<1x128xf32>
    %cst_39 = arith.constant 0.142857149 : f32
    %68 = vector.broadcast %cst_39 : f32 to vector<1x128xf32>
    %69 = arith.mulf %51, %68 : vector<1x128xf32>
    %cst_40 = arith.constant 0.142857149 : f32
    %70 = vector.broadcast %cst_40 : f32 to vector<1x128xf32>
    %71 = arith.mulf %53, %70 : vector<1x128xf32>
    %cst_41 = arith.constant 0.142857149 : f32
    %72 = vector.broadcast %cst_41 : f32 to vector<1x128xf32>
    %73 = arith.mulf %55, %72 : vector<1x128xf32>
    %cst_42 = arith.constant 1.000000e+00 : f32
    %74 = vector.broadcast %cst_42 : f32 to vector<1x128xf32>
    %75 = arith.addf %57, %74 : vector<1x128xf32>
    %cst_43 = arith.constant 1.000000e+00 : f32
    %76 = vector.broadcast %cst_43 : f32 to vector<1x128xf32>
    %77 = arith.addf %65, %76 : vector<1x128xf32>
    %cst_44 = arith.constant 1.000000e+00 : f32
    %78 = vector.broadcast %cst_44 : f32 to vector<1x128xf32>
    %79 = arith.addf %73, %78 : vector<1x128xf32>
    %80 = arith.mulf %39, %75 : vector<1x128xf32>
    %81 = arith.mulf %41, %63 : vector<1x128xf32>
    %82 = arith.addf %80, %81 : vector<1x128xf32>
    %83 = arith.mulf %43, %69 : vector<1x128xf32>
    %84 = arith.addf %82, %83 : vector<1x128xf32>
    %85 = arith.mulf %39, %59 : vector<1x128xf32>
    %86 = arith.mulf %41, %77 : vector<1x128xf32>
    %87 = arith.addf %85, %86 : vector<1x128xf32>
    %88 = arith.mulf %43, %71 : vector<1x128xf32>
    %89 = arith.addf %87, %88 : vector<1x128xf32>
    %90 = arith.mulf %39, %61 : vector<1x128xf32>
    %91 = arith.mulf %41, %67 : vector<1x128xf32>
    %92 = arith.addf %90, %91 : vector<1x128xf32>
    %93 = arith.mulf %43, %79 : vector<1x128xf32>
    %94 = arith.addf %92, %93 : vector<1x128xf32>
    %95 = arith.mulf %45, %75 : vector<1x128xf32>
    %96 = arith.mulf %47, %63 : vector<1x128xf32>
    %97 = arith.addf %95, %96 : vector<1x128xf32>
    %98 = arith.mulf %49, %69 : vector<1x128xf32>
    %99 = arith.addf %97, %98 : vector<1x128xf32>
    %100 = arith.mulf %45, %59 : vector<1x128xf32>
    %101 = arith.mulf %47, %77 : vector<1x128xf32>
    %102 = arith.addf %100, %101 : vector<1x128xf32>
    %103 = arith.mulf %49, %71 : vector<1x128xf32>
    %104 = arith.addf %102, %103 : vector<1x128xf32>
    %105 = arith.mulf %45, %61 : vector<1x128xf32>
    %106 = arith.mulf %47, %67 : vector<1x128xf32>
    %107 = arith.addf %105, %106 : vector<1x128xf32>
    %108 = arith.mulf %49, %79 : vector<1x128xf32>
    %109 = arith.addf %107, %108 : vector<1x128xf32>
    %110 = arith.mulf %51, %75 : vector<1x128xf32>
    %111 = arith.mulf %53, %63 : vector<1x128xf32>
    %112 = arith.addf %110, %111 : vector<1x128xf32>
    %113 = arith.mulf %55, %69 : vector<1x128xf32>
    %114 = arith.addf %112, %113 : vector<1x128xf32>
    %115 = arith.mulf %51, %59 : vector<1x128xf32>
    %116 = arith.mulf %53, %77 : vector<1x128xf32>
    %117 = arith.addf %115, %116 : vector<1x128xf32>
    %118 = arith.mulf %55, %71 : vector<1x128xf32>
    %119 = arith.addf %117, %118 : vector<1x128xf32>
    %120 = arith.mulf %51, %61 : vector<1x128xf32>
    %121 = arith.mulf %53, %67 : vector<1x128xf32>
    %122 = arith.addf %120, %121 : vector<1x128xf32>
    %123 = arith.mulf %55, %79 : vector<1x128xf32>
    %124 = arith.addf %122, %123 : vector<1x128xf32>
    %cst_45 = arith.constant 0.166666672 : f32
    %125 = vector.broadcast %cst_45 : f32 to vector<1x128xf32>
    %126 = arith.mulf %84, %125 : vector<1x128xf32>
    %cst_46 = arith.constant 0.166666672 : f32
    %127 = vector.broadcast %cst_46 : f32 to vector<1x128xf32>
    %128 = arith.mulf %89, %127 : vector<1x128xf32>
    %cst_47 = arith.constant 0.166666672 : f32
    %129 = vector.broadcast %cst_47 : f32 to vector<1x128xf32>
    %130 = arith.mulf %94, %129 : vector<1x128xf32>
    %cst_48 = arith.constant 0.166666672 : f32
    %131 = vector.broadcast %cst_48 : f32 to vector<1x128xf32>
    %132 = arith.mulf %99, %131 : vector<1x128xf32>
    %cst_49 = arith.constant 0.166666672 : f32
    %133 = vector.broadcast %cst_49 : f32 to vector<1x128xf32>
    %134 = arith.mulf %104, %133 : vector<1x128xf32>
    %cst_50 = arith.constant 0.166666672 : f32
    %135 = vector.broadcast %cst_50 : f32 to vector<1x128xf32>
    %136 = arith.mulf %109, %135 : vector<1x128xf32>
    %cst_51 = arith.constant 0.166666672 : f32
    %137 = vector.broadcast %cst_51 : f32 to vector<1x128xf32>
    %138 = arith.mulf %114, %137 : vector<1x128xf32>
    %cst_52 = arith.constant 0.166666672 : f32
    %139 = vector.broadcast %cst_52 : f32 to vector<1x128xf32>
    %140 = arith.mulf %119, %139 : vector<1x128xf32>
    %cst_53 = arith.constant 0.166666672 : f32
    %141 = vector.broadcast %cst_53 : f32 to vector<1x128xf32>
    %142 = arith.mulf %124, %141 : vector<1x128xf32>
    %cst_54 = arith.constant 1.000000e+00 : f32
    %143 = vector.broadcast %cst_54 : f32 to vector<1x128xf32>
    %144 = arith.addf %126, %143 : vector<1x128xf32>
    %cst_55 = arith.constant 1.000000e+00 : f32
    %145 = vector.broadcast %cst_55 : f32 to vector<1x128xf32>
    %146 = arith.addf %134, %145 : vector<1x128xf32>
    %cst_56 = arith.constant 1.000000e+00 : f32
    %147 = vector.broadcast %cst_56 : f32 to vector<1x128xf32>
    %148 = arith.addf %142, %147 : vector<1x128xf32>
    %149 = arith.mulf %39, %144 : vector<1x128xf32>
    %150 = arith.mulf %41, %132 : vector<1x128xf32>
    %151 = arith.addf %149, %150 : vector<1x128xf32>
    %152 = arith.mulf %43, %138 : vector<1x128xf32>
    %153 = arith.addf %151, %152 : vector<1x128xf32>
    %154 = arith.mulf %39, %128 : vector<1x128xf32>
    %155 = arith.mulf %41, %146 : vector<1x128xf32>
    %156 = arith.addf %154, %155 : vector<1x128xf32>
    %157 = arith.mulf %43, %140 : vector<1x128xf32>
    %158 = arith.addf %156, %157 : vector<1x128xf32>
    %159 = arith.mulf %39, %130 : vector<1x128xf32>
    %160 = arith.mulf %41, %136 : vector<1x128xf32>
    %161 = arith.addf %159, %160 : vector<1x128xf32>
    %162 = arith.mulf %43, %148 : vector<1x128xf32>
    %163 = arith.addf %161, %162 : vector<1x128xf32>
    %164 = arith.mulf %45, %144 : vector<1x128xf32>
    %165 = arith.mulf %47, %132 : vector<1x128xf32>
    %166 = arith.addf %164, %165 : vector<1x128xf32>
    %167 = arith.mulf %49, %138 : vector<1x128xf32>
    %168 = arith.addf %166, %167 : vector<1x128xf32>
    %169 = arith.mulf %45, %128 : vector<1x128xf32>
    %170 = arith.mulf %47, %146 : vector<1x128xf32>
    %171 = arith.addf %169, %170 : vector<1x128xf32>
    %172 = arith.mulf %49, %140 : vector<1x128xf32>
    %173 = arith.addf %171, %172 : vector<1x128xf32>
    %174 = arith.mulf %45, %130 : vector<1x128xf32>
    %175 = arith.mulf %47, %136 : vector<1x128xf32>
    %176 = arith.addf %174, %175 : vector<1x128xf32>
    %177 = arith.mulf %49, %148 : vector<1x128xf32>
    %178 = arith.addf %176, %177 : vector<1x128xf32>
    %179 = arith.mulf %51, %144 : vector<1x128xf32>
    %180 = arith.mulf %53, %132 : vector<1x128xf32>
    %181 = arith.addf %179, %180 : vector<1x128xf32>
    %182 = arith.mulf %55, %138 : vector<1x128xf32>
    %183 = arith.addf %181, %182 : vector<1x128xf32>
    %184 = arith.mulf %51, %128 : vector<1x128xf32>
    %185 = arith.mulf %53, %146 : vector<1x128xf32>
    %186 = arith.addf %184, %185 : vector<1x128xf32>
    %187 = arith.mulf %55, %140 : vector<1x128xf32>
    %188 = arith.addf %186, %187 : vector<1x128xf32>
    %189 = arith.mulf %51, %130 : vector<1x128xf32>
    %190 = arith.mulf %53, %136 : vector<1x128xf32>
    %191 = arith.addf %189, %190 : vector<1x128xf32>
    %192 = arith.mulf %55, %148 : vector<1x128xf32>
    %193 = arith.addf %191, %192 : vector<1x128xf32>
    %cst_57 = arith.constant 2.000000e-01 : f32
    %194 = vector.broadcast %cst_57 : f32 to vector<1x128xf32>
    %195 = arith.mulf %153, %194 : vector<1x128xf32>
    %cst_58 = arith.constant 2.000000e-01 : f32
    %196 = vector.broadcast %cst_58 : f32 to vector<1x128xf32>
    %197 = arith.mulf %158, %196 : vector<1x128xf32>
    %cst_59 = arith.constant 2.000000e-01 : f32
    %198 = vector.broadcast %cst_59 : f32 to vector<1x128xf32>
    %199 = arith.mulf %163, %198 : vector<1x128xf32>
    %cst_60 = arith.constant 2.000000e-01 : f32
    %200 = vector.broadcast %cst_60 : f32 to vector<1x128xf32>
    %201 = arith.mulf %168, %200 : vector<1x128xf32>
    %cst_61 = arith.constant 2.000000e-01 : f32
    %202 = vector.broadcast %cst_61 : f32 to vector<1x128xf32>
    %203 = arith.mulf %173, %202 : vector<1x128xf32>
    %cst_62 = arith.constant 2.000000e-01 : f32
    %204 = vector.broadcast %cst_62 : f32 to vector<1x128xf32>
    %205 = arith.mulf %178, %204 : vector<1x128xf32>
    %cst_63 = arith.constant 2.000000e-01 : f32
    %206 = vector.broadcast %cst_63 : f32 to vector<1x128xf32>
    %207 = arith.mulf %183, %206 : vector<1x128xf32>
    %cst_64 = arith.constant 2.000000e-01 : f32
    %208 = vector.broadcast %cst_64 : f32 to vector<1x128xf32>
    %209 = arith.mulf %188, %208 : vector<1x128xf32>
    %cst_65 = arith.constant 2.000000e-01 : f32
    %210 = vector.broadcast %cst_65 : f32 to vector<1x128xf32>
    %211 = arith.mulf %193, %210 : vector<1x128xf32>
    %cst_66 = arith.constant 1.000000e+00 : f32
    %212 = vector.broadcast %cst_66 : f32 to vector<1x128xf32>
    %213 = arith.addf %195, %212 : vector<1x128xf32>
    %cst_67 = arith.constant 1.000000e+00 : f32
    %214 = vector.broadcast %cst_67 : f32 to vector<1x128xf32>
    %215 = arith.addf %203, %214 : vector<1x128xf32>
    %cst_68 = arith.constant 1.000000e+00 : f32
    %216 = vector.broadcast %cst_68 : f32 to vector<1x128xf32>
    %217 = arith.addf %211, %216 : vector<1x128xf32>
    %218 = arith.mulf %39, %213 : vector<1x128xf32>
    %219 = arith.mulf %41, %201 : vector<1x128xf32>
    %220 = arith.addf %218, %219 : vector<1x128xf32>
    %221 = arith.mulf %43, %207 : vector<1x128xf32>
    %222 = arith.addf %220, %221 : vector<1x128xf32>
    %223 = arith.mulf %39, %197 : vector<1x128xf32>
    %224 = arith.mulf %41, %215 : vector<1x128xf32>
    %225 = arith.addf %223, %224 : vector<1x128xf32>
    %226 = arith.mulf %43, %209 : vector<1x128xf32>
    %227 = arith.addf %225, %226 : vector<1x128xf32>
    %228 = arith.mulf %39, %199 : vector<1x128xf32>
    %229 = arith.mulf %41, %205 : vector<1x128xf32>
    %230 = arith.addf %228, %229 : vector<1x128xf32>
    %231 = arith.mulf %43, %217 : vector<1x128xf32>
    %232 = arith.addf %230, %231 : vector<1x128xf32>
    %233 = arith.mulf %45, %213 : vector<1x128xf32>
    %234 = arith.mulf %47, %201 : vector<1x128xf32>
    %235 = arith.addf %233, %234 : vector<1x128xf32>
    %236 = arith.mulf %49, %207 : vector<1x128xf32>
    %237 = arith.addf %235, %236 : vector<1x128xf32>
    %238 = arith.mulf %45, %197 : vector<1x128xf32>
    %239 = arith.mulf %47, %215 : vector<1x128xf32>
    %240 = arith.addf %238, %239 : vector<1x128xf32>
    %241 = arith.mulf %49, %209 : vector<1x128xf32>
    %242 = arith.addf %240, %241 : vector<1x128xf32>
    %243 = arith.mulf %45, %199 : vector<1x128xf32>
    %244 = arith.mulf %47, %205 : vector<1x128xf32>
    %245 = arith.addf %243, %244 : vector<1x128xf32>
    %246 = arith.mulf %49, %217 : vector<1x128xf32>
    %247 = arith.addf %245, %246 : vector<1x128xf32>
    %248 = arith.mulf %51, %213 : vector<1x128xf32>
    %249 = arith.mulf %53, %201 : vector<1x128xf32>
    %250 = arith.addf %248, %249 : vector<1x128xf32>
    %251 = arith.mulf %55, %207 : vector<1x128xf32>
    %252 = arith.addf %250, %251 : vector<1x128xf32>
    %253 = arith.mulf %51, %197 : vector<1x128xf32>
    %254 = arith.mulf %53, %215 : vector<1x128xf32>
    %255 = arith.addf %253, %254 : vector<1x128xf32>
    %256 = arith.mulf %55, %209 : vector<1x128xf32>
    %257 = arith.addf %255, %256 : vector<1x128xf32>
    %258 = arith.mulf %51, %199 : vector<1x128xf32>
    %259 = arith.mulf %53, %205 : vector<1x128xf32>
    %260 = arith.addf %258, %259 : vector<1x128xf32>
    %261 = arith.mulf %55, %217 : vector<1x128xf32>
    %262 = arith.addf %260, %261 : vector<1x128xf32>
    %cst_69 = arith.constant 2.500000e-01 : f32
    %263 = vector.broadcast %cst_69 : f32 to vector<1x128xf32>
    %264 = arith.mulf %222, %263 : vector<1x128xf32>
    %cst_70 = arith.constant 2.500000e-01 : f32
    %265 = vector.broadcast %cst_70 : f32 to vector<1x128xf32>
    %266 = arith.mulf %227, %265 : vector<1x128xf32>
    %cst_71 = arith.constant 2.500000e-01 : f32
    %267 = vector.broadcast %cst_71 : f32 to vector<1x128xf32>
    %268 = arith.mulf %232, %267 : vector<1x128xf32>
    %cst_72 = arith.constant 2.500000e-01 : f32
    %269 = vector.broadcast %cst_72 : f32 to vector<1x128xf32>
    %270 = arith.mulf %237, %269 : vector<1x128xf32>
    %cst_73 = arith.constant 2.500000e-01 : f32
    %271 = vector.broadcast %cst_73 : f32 to vector<1x128xf32>
    %272 = arith.mulf %242, %271 : vector<1x128xf32>
    %cst_74 = arith.constant 2.500000e-01 : f32
    %273 = vector.broadcast %cst_74 : f32 to vector<1x128xf32>
    %274 = arith.mulf %247, %273 : vector<1x128xf32>
    %cst_75 = arith.constant 2.500000e-01 : f32
    %275 = vector.broadcast %cst_75 : f32 to vector<1x128xf32>
    %276 = arith.mulf %252, %275 : vector<1x128xf32>
    %cst_76 = arith.constant 2.500000e-01 : f32
    %277 = vector.broadcast %cst_76 : f32 to vector<1x128xf32>
    %278 = arith.mulf %257, %277 : vector<1x128xf32>
    %cst_77 = arith.constant 2.500000e-01 : f32
    %279 = vector.broadcast %cst_77 : f32 to vector<1x128xf32>
    %280 = arith.mulf %262, %279 : vector<1x128xf32>
    %cst_78 = arith.constant 1.000000e+00 : f32
    %281 = vector.broadcast %cst_78 : f32 to vector<1x128xf32>
    %282 = arith.addf %264, %281 : vector<1x128xf32>
    %cst_79 = arith.constant 1.000000e+00 : f32
    %283 = vector.broadcast %cst_79 : f32 to vector<1x128xf32>
    %284 = arith.addf %272, %283 : vector<1x128xf32>
    %cst_80 = arith.constant 1.000000e+00 : f32
    %285 = vector.broadcast %cst_80 : f32 to vector<1x128xf32>
    %286 = arith.addf %280, %285 : vector<1x128xf32>
    %287 = arith.mulf %39, %282 : vector<1x128xf32>
    %288 = arith.mulf %41, %270 : vector<1x128xf32>
    %289 = arith.addf %287, %288 : vector<1x128xf32>
    %290 = arith.mulf %43, %276 : vector<1x128xf32>
    %291 = arith.addf %289, %290 : vector<1x128xf32>
    %292 = arith.mulf %39, %266 : vector<1x128xf32>
    %293 = arith.mulf %41, %284 : vector<1x128xf32>
    %294 = arith.addf %292, %293 : vector<1x128xf32>
    %295 = arith.mulf %43, %278 : vector<1x128xf32>
    %296 = arith.addf %294, %295 : vector<1x128xf32>
    %297 = arith.mulf %39, %268 : vector<1x128xf32>
    %298 = arith.mulf %41, %274 : vector<1x128xf32>
    %299 = arith.addf %297, %298 : vector<1x128xf32>
    %300 = arith.mulf %43, %286 : vector<1x128xf32>
    %301 = arith.addf %299, %300 : vector<1x128xf32>
    %302 = arith.mulf %45, %282 : vector<1x128xf32>
    %303 = arith.mulf %47, %270 : vector<1x128xf32>
    %304 = arith.addf %302, %303 : vector<1x128xf32>
    %305 = arith.mulf %49, %276 : vector<1x128xf32>
    %306 = arith.addf %304, %305 : vector<1x128xf32>
    %307 = arith.mulf %45, %266 : vector<1x128xf32>
    %308 = arith.mulf %47, %284 : vector<1x128xf32>
    %309 = arith.addf %307, %308 : vector<1x128xf32>
    %310 = arith.mulf %49, %278 : vector<1x128xf32>
    %311 = arith.addf %309, %310 : vector<1x128xf32>
    %312 = arith.mulf %45, %268 : vector<1x128xf32>
    %313 = arith.mulf %47, %274 : vector<1x128xf32>
    %314 = arith.addf %312, %313 : vector<1x128xf32>
    %315 = arith.mulf %49, %286 : vector<1x128xf32>
    %316 = arith.addf %314, %315 : vector<1x128xf32>
    %317 = arith.mulf %51, %282 : vector<1x128xf32>
    %318 = arith.mulf %53, %270 : vector<1x128xf32>
    %319 = arith.addf %317, %318 : vector<1x128xf32>
    %320 = arith.mulf %55, %276 : vector<1x128xf32>
    %321 = arith.addf %319, %320 : vector<1x128xf32>
    %322 = arith.mulf %51, %266 : vector<1x128xf32>
    %323 = arith.mulf %53, %284 : vector<1x128xf32>
    %324 = arith.addf %322, %323 : vector<1x128xf32>
    %325 = arith.mulf %55, %278 : vector<1x128xf32>
    %326 = arith.addf %324, %325 : vector<1x128xf32>
    %327 = arith.mulf %51, %268 : vector<1x128xf32>
    %328 = arith.mulf %53, %274 : vector<1x128xf32>
    %329 = arith.addf %327, %328 : vector<1x128xf32>
    %330 = arith.mulf %55, %286 : vector<1x128xf32>
    %331 = arith.addf %329, %330 : vector<1x128xf32>
    %cst_81 = arith.constant 0.333333343 : f32
    %332 = vector.broadcast %cst_81 : f32 to vector<1x128xf32>
    %333 = arith.mulf %291, %332 : vector<1x128xf32>
    %cst_82 = arith.constant 0.333333343 : f32
    %334 = vector.broadcast %cst_82 : f32 to vector<1x128xf32>
    %335 = arith.mulf %296, %334 : vector<1x128xf32>
    %cst_83 = arith.constant 0.333333343 : f32
    %336 = vector.broadcast %cst_83 : f32 to vector<1x128xf32>
    %337 = arith.mulf %301, %336 : vector<1x128xf32>
    %cst_84 = arith.constant 0.333333343 : f32
    %338 = vector.broadcast %cst_84 : f32 to vector<1x128xf32>
    %339 = arith.mulf %306, %338 : vector<1x128xf32>
    %cst_85 = arith.constant 0.333333343 : f32
    %340 = vector.broadcast %cst_85 : f32 to vector<1x128xf32>
    %341 = arith.mulf %311, %340 : vector<1x128xf32>
    %cst_86 = arith.constant 0.333333343 : f32
    %342 = vector.broadcast %cst_86 : f32 to vector<1x128xf32>
    %343 = arith.mulf %316, %342 : vector<1x128xf32>
    %cst_87 = arith.constant 0.333333343 : f32
    %344 = vector.broadcast %cst_87 : f32 to vector<1x128xf32>
    %345 = arith.mulf %321, %344 : vector<1x128xf32>
    %cst_88 = arith.constant 0.333333343 : f32
    %346 = vector.broadcast %cst_88 : f32 to vector<1x128xf32>
    %347 = arith.mulf %326, %346 : vector<1x128xf32>
    %cst_89 = arith.constant 0.333333343 : f32
    %348 = vector.broadcast %cst_89 : f32 to vector<1x128xf32>
    %349 = arith.mulf %331, %348 : vector<1x128xf32>
    %cst_90 = arith.constant 1.000000e+00 : f32
    %350 = vector.broadcast %cst_90 : f32 to vector<1x128xf32>
    %351 = arith.addf %333, %350 : vector<1x128xf32>
    %cst_91 = arith.constant 1.000000e+00 : f32
    %352 = vector.broadcast %cst_91 : f32 to vector<1x128xf32>
    %353 = arith.addf %341, %352 : vector<1x128xf32>
    %cst_92 = arith.constant 1.000000e+00 : f32
    %354 = vector.broadcast %cst_92 : f32 to vector<1x128xf32>
    %355 = arith.addf %349, %354 : vector<1x128xf32>
    %356 = arith.mulf %39, %351 : vector<1x128xf32>
    %357 = arith.mulf %41, %339 : vector<1x128xf32>
    %358 = arith.addf %356, %357 : vector<1x128xf32>
    %359 = arith.mulf %43, %345 : vector<1x128xf32>
    %360 = arith.addf %358, %359 : vector<1x128xf32>
    %361 = arith.mulf %39, %335 : vector<1x128xf32>
    %362 = arith.mulf %41, %353 : vector<1x128xf32>
    %363 = arith.addf %361, %362 : vector<1x128xf32>
    %364 = arith.mulf %43, %347 : vector<1x128xf32>
    %365 = arith.addf %363, %364 : vector<1x128xf32>
    %366 = arith.mulf %39, %337 : vector<1x128xf32>
    %367 = arith.mulf %41, %343 : vector<1x128xf32>
    %368 = arith.addf %366, %367 : vector<1x128xf32>
    %369 = arith.mulf %43, %355 : vector<1x128xf32>
    %370 = arith.addf %368, %369 : vector<1x128xf32>
    %371 = arith.mulf %45, %351 : vector<1x128xf32>
    %372 = arith.mulf %47, %339 : vector<1x128xf32>
    %373 = arith.addf %371, %372 : vector<1x128xf32>
    %374 = arith.mulf %49, %345 : vector<1x128xf32>
    %375 = arith.addf %373, %374 : vector<1x128xf32>
    %376 = arith.mulf %45, %335 : vector<1x128xf32>
    %377 = arith.mulf %47, %353 : vector<1x128xf32>
    %378 = arith.addf %376, %377 : vector<1x128xf32>
    %379 = arith.mulf %49, %347 : vector<1x128xf32>
    %380 = arith.addf %378, %379 : vector<1x128xf32>
    %381 = arith.mulf %45, %337 : vector<1x128xf32>
    %382 = arith.mulf %47, %343 : vector<1x128xf32>
    %383 = arith.addf %381, %382 : vector<1x128xf32>
    %384 = arith.mulf %49, %355 : vector<1x128xf32>
    %385 = arith.addf %383, %384 : vector<1x128xf32>
    %386 = arith.mulf %51, %351 : vector<1x128xf32>
    %387 = arith.mulf %53, %339 : vector<1x128xf32>
    %388 = arith.addf %386, %387 : vector<1x128xf32>
    %389 = arith.mulf %55, %345 : vector<1x128xf32>
    %390 = arith.addf %388, %389 : vector<1x128xf32>
    %391 = arith.mulf %51, %335 : vector<1x128xf32>
    %392 = arith.mulf %53, %353 : vector<1x128xf32>
    %393 = arith.addf %391, %392 : vector<1x128xf32>
    %394 = arith.mulf %55, %347 : vector<1x128xf32>
    %395 = arith.addf %393, %394 : vector<1x128xf32>
    %396 = arith.mulf %51, %337 : vector<1x128xf32>
    %397 = arith.mulf %53, %343 : vector<1x128xf32>
    %398 = arith.addf %396, %397 : vector<1x128xf32>
    %399 = arith.mulf %55, %355 : vector<1x128xf32>
    %400 = arith.addf %398, %399 : vector<1x128xf32>
    %cst_93 = arith.constant 5.000000e-01 : f32
    %401 = vector.broadcast %cst_93 : f32 to vector<1x128xf32>
    %402 = arith.mulf %360, %401 : vector<1x128xf32>
    %cst_94 = arith.constant 5.000000e-01 : f32
    %403 = vector.broadcast %cst_94 : f32 to vector<1x128xf32>
    %404 = arith.mulf %365, %403 : vector<1x128xf32>
    %cst_95 = arith.constant 5.000000e-01 : f32
    %405 = vector.broadcast %cst_95 : f32 to vector<1x128xf32>
    %406 = arith.mulf %370, %405 : vector<1x128xf32>
    %cst_96 = arith.constant 5.000000e-01 : f32
    %407 = vector.broadcast %cst_96 : f32 to vector<1x128xf32>
    %408 = arith.mulf %375, %407 : vector<1x128xf32>
    %cst_97 = arith.constant 5.000000e-01 : f32
    %409 = vector.broadcast %cst_97 : f32 to vector<1x128xf32>
    %410 = arith.mulf %380, %409 : vector<1x128xf32>
    %cst_98 = arith.constant 5.000000e-01 : f32
    %411 = vector.broadcast %cst_98 : f32 to vector<1x128xf32>
    %412 = arith.mulf %385, %411 : vector<1x128xf32>
    %cst_99 = arith.constant 5.000000e-01 : f32
    %413 = vector.broadcast %cst_99 : f32 to vector<1x128xf32>
    %414 = arith.mulf %390, %413 : vector<1x128xf32>
    %cst_100 = arith.constant 5.000000e-01 : f32
    %415 = vector.broadcast %cst_100 : f32 to vector<1x128xf32>
    %416 = arith.mulf %395, %415 : vector<1x128xf32>
    %cst_101 = arith.constant 5.000000e-01 : f32
    %417 = vector.broadcast %cst_101 : f32 to vector<1x128xf32>
    %418 = arith.mulf %400, %417 : vector<1x128xf32>
    %cst_102 = arith.constant 1.000000e+00 : f32
    %419 = vector.broadcast %cst_102 : f32 to vector<1x128xf32>
    %420 = arith.addf %402, %419 : vector<1x128xf32>
    %cst_103 = arith.constant 1.000000e+00 : f32
    %421 = vector.broadcast %cst_103 : f32 to vector<1x128xf32>
    %422 = arith.addf %410, %421 : vector<1x128xf32>
    %cst_104 = arith.constant 1.000000e+00 : f32
    %423 = vector.broadcast %cst_104 : f32 to vector<1x128xf32>
    %424 = arith.addf %418, %423 : vector<1x128xf32>
    %425 = arith.mulf %39, %420 : vector<1x128xf32>
    %426 = arith.mulf %41, %408 : vector<1x128xf32>
    %427 = arith.addf %425, %426 : vector<1x128xf32>
    %428 = arith.mulf %43, %414 : vector<1x128xf32>
    %429 = arith.addf %427, %428 : vector<1x128xf32>
    %430 = arith.mulf %39, %404 : vector<1x128xf32>
    %431 = arith.mulf %41, %422 : vector<1x128xf32>
    %432 = arith.addf %430, %431 : vector<1x128xf32>
    %433 = arith.mulf %43, %416 : vector<1x128xf32>
    %434 = arith.addf %432, %433 : vector<1x128xf32>
    %435 = arith.mulf %39, %406 : vector<1x128xf32>
    %436 = arith.mulf %41, %412 : vector<1x128xf32>
    %437 = arith.addf %435, %436 : vector<1x128xf32>
    %438 = arith.mulf %43, %424 : vector<1x128xf32>
    %439 = arith.addf %437, %438 : vector<1x128xf32>
    %440 = arith.mulf %45, %420 : vector<1x128xf32>
    %441 = arith.mulf %47, %408 : vector<1x128xf32>
    %442 = arith.addf %440, %441 : vector<1x128xf32>
    %443 = arith.mulf %49, %414 : vector<1x128xf32>
    %444 = arith.addf %442, %443 : vector<1x128xf32>
    %445 = arith.mulf %45, %404 : vector<1x128xf32>
    %446 = arith.mulf %47, %422 : vector<1x128xf32>
    %447 = arith.addf %445, %446 : vector<1x128xf32>
    %448 = arith.mulf %49, %416 : vector<1x128xf32>
    %449 = arith.addf %447, %448 : vector<1x128xf32>
    %450 = arith.mulf %45, %406 : vector<1x128xf32>
    %451 = arith.mulf %47, %412 : vector<1x128xf32>
    %452 = arith.addf %450, %451 : vector<1x128xf32>
    %453 = arith.mulf %49, %424 : vector<1x128xf32>
    %454 = arith.addf %452, %453 : vector<1x128xf32>
    %455 = arith.mulf %51, %420 : vector<1x128xf32>
    %456 = arith.mulf %53, %408 : vector<1x128xf32>
    %457 = arith.addf %455, %456 : vector<1x128xf32>
    %458 = arith.mulf %55, %414 : vector<1x128xf32>
    %459 = arith.addf %457, %458 : vector<1x128xf32>
    %460 = arith.mulf %51, %404 : vector<1x128xf32>
    %461 = arith.mulf %53, %422 : vector<1x128xf32>
    %462 = arith.addf %460, %461 : vector<1x128xf32>
    %463 = arith.mulf %55, %416 : vector<1x128xf32>
    %464 = arith.addf %462, %463 : vector<1x128xf32>
    %465 = arith.mulf %51, %406 : vector<1x128xf32>
    %466 = arith.mulf %53, %412 : vector<1x128xf32>
    %467 = arith.addf %465, %466 : vector<1x128xf32>
    %468 = arith.mulf %55, %424 : vector<1x128xf32>
    %469 = arith.addf %467, %468 : vector<1x128xf32>
    %cst_105 = arith.constant 1.000000e+00 : f32
    %470 = vector.broadcast %cst_105 : f32 to vector<1x128xf32>
    %471 = arith.mulf %429, %470 : vector<1x128xf32>
    %cst_106 = arith.constant 1.000000e+00 : f32
    %472 = vector.broadcast %cst_106 : f32 to vector<1x128xf32>
    %473 = arith.mulf %434, %472 : vector<1x128xf32>
    %cst_107 = arith.constant 1.000000e+00 : f32
    %474 = vector.broadcast %cst_107 : f32 to vector<1x128xf32>
    %475 = arith.mulf %439, %474 : vector<1x128xf32>
    %cst_108 = arith.constant 1.000000e+00 : f32
    %476 = vector.broadcast %cst_108 : f32 to vector<1x128xf32>
    %477 = arith.mulf %444, %476 : vector<1x128xf32>
    %cst_109 = arith.constant 1.000000e+00 : f32
    %478 = vector.broadcast %cst_109 : f32 to vector<1x128xf32>
    %479 = arith.mulf %449, %478 : vector<1x128xf32>
    %cst_110 = arith.constant 1.000000e+00 : f32
    %480 = vector.broadcast %cst_110 : f32 to vector<1x128xf32>
    %481 = arith.mulf %454, %480 : vector<1x128xf32>
    %cst_111 = arith.constant 1.000000e+00 : f32
    %482 = vector.broadcast %cst_111 : f32 to vector<1x128xf32>
    %483 = arith.mulf %459, %482 : vector<1x128xf32>
    %cst_112 = arith.constant 1.000000e+00 : f32
    %484 = vector.broadcast %cst_112 : f32 to vector<1x128xf32>
    %485 = arith.mulf %464, %484 : vector<1x128xf32>
    %cst_113 = arith.constant 1.000000e+00 : f32
    %486 = vector.broadcast %cst_113 : f32 to vector<1x128xf32>
    %487 = arith.mulf %469, %486 : vector<1x128xf32>
    %cst_114 = arith.constant 1.000000e+00 : f32
    %488 = vector.broadcast %cst_114 : f32 to vector<1x128xf32>
    %489 = arith.addf %471, %488 : vector<1x128xf32>
    %cst_115 = arith.constant 1.000000e+00 : f32
    %490 = vector.broadcast %cst_115 : f32 to vector<1x128xf32>
    %491 = arith.addf %479, %490 : vector<1x128xf32>
    %cst_116 = arith.constant 1.000000e+00 : f32
    %492 = vector.broadcast %cst_116 : f32 to vector<1x128xf32>
    %493 = arith.addf %487, %492 : vector<1x128xf32>
    %494 = arith.mulf %489, %489 : vector<1x128xf32>
    %495 = arith.mulf %473, %477 : vector<1x128xf32>
    %496 = arith.addf %494, %495 : vector<1x128xf32>
    %497 = arith.mulf %475, %483 : vector<1x128xf32>
    %498 = arith.addf %496, %497 : vector<1x128xf32>
    %499 = arith.mulf %489, %473 : vector<1x128xf32>
    %500 = arith.mulf %473, %491 : vector<1x128xf32>
    %501 = arith.addf %499, %500 : vector<1x128xf32>
    %502 = arith.mulf %475, %485 : vector<1x128xf32>
    %503 = arith.addf %501, %502 : vector<1x128xf32>
    %504 = arith.mulf %489, %475 : vector<1x128xf32>
    %505 = arith.mulf %473, %481 : vector<1x128xf32>
    %506 = arith.addf %504, %505 : vector<1x128xf32>
    %507 = arith.mulf %475, %493 : vector<1x128xf32>
    %508 = arith.addf %506, %507 : vector<1x128xf32>
    %509 = arith.mulf %477, %489 : vector<1x128xf32>
    %510 = arith.mulf %491, %477 : vector<1x128xf32>
    %511 = arith.addf %509, %510 : vector<1x128xf32>
    %512 = arith.mulf %481, %483 : vector<1x128xf32>
    %513 = arith.addf %511, %512 : vector<1x128xf32>
    %514 = arith.mulf %477, %473 : vector<1x128xf32>
    %515 = arith.mulf %491, %491 : vector<1x128xf32>
    %516 = arith.addf %514, %515 : vector<1x128xf32>
    %517 = arith.mulf %481, %485 : vector<1x128xf32>
    %518 = arith.addf %516, %517 : vector<1x128xf32>
    %519 = arith.mulf %477, %475 : vector<1x128xf32>
    %520 = arith.mulf %491, %481 : vector<1x128xf32>
    %521 = arith.addf %519, %520 : vector<1x128xf32>
    %522 = arith.mulf %481, %493 : vector<1x128xf32>
    %523 = arith.addf %521, %522 : vector<1x128xf32>
    %524 = arith.mulf %483, %489 : vector<1x128xf32>
    %525 = arith.mulf %485, %477 : vector<1x128xf32>
    %526 = arith.addf %524, %525 : vector<1x128xf32>
    %527 = arith.mulf %493, %483 : vector<1x128xf32>
    %528 = arith.addf %526, %527 : vector<1x128xf32>
    %529 = arith.mulf %483, %473 : vector<1x128xf32>
    %530 = arith.mulf %485, %491 : vector<1x128xf32>
    %531 = arith.addf %529, %530 : vector<1x128xf32>
    %532 = arith.mulf %493, %485 : vector<1x128xf32>
    %533 = arith.addf %531, %532 : vector<1x128xf32>
    %534 = arith.mulf %483, %475 : vector<1x128xf32>
    %535 = arith.mulf %485, %481 : vector<1x128xf32>
    %536 = arith.addf %534, %535 : vector<1x128xf32>
    %537 = arith.mulf %493, %493 : vector<1x128xf32>
    %538 = arith.addf %536, %537 : vector<1x128xf32>
    %539 = arith.mulf %498, %498 : vector<1x128xf32>
    %540 = arith.mulf %503, %513 : vector<1x128xf32>
    %541 = arith.addf %539, %540 : vector<1x128xf32>
    %542 = arith.mulf %508, %528 : vector<1x128xf32>
    %543 = arith.addf %541, %542 : vector<1x128xf32>
    %544 = arith.mulf %498, %503 : vector<1x128xf32>
    %545 = arith.mulf %503, %518 : vector<1x128xf32>
    %546 = arith.addf %544, %545 : vector<1x128xf32>
    %547 = arith.mulf %508, %533 : vector<1x128xf32>
    %548 = arith.addf %546, %547 : vector<1x128xf32>
    %549 = arith.mulf %498, %508 : vector<1x128xf32>
    %550 = arith.mulf %503, %523 : vector<1x128xf32>
    %551 = arith.addf %549, %550 : vector<1x128xf32>
    %552 = arith.mulf %508, %538 : vector<1x128xf32>
    %553 = arith.addf %551, %552 : vector<1x128xf32>
    %554 = arith.mulf %513, %498 : vector<1x128xf32>
    %555 = arith.mulf %518, %513 : vector<1x128xf32>
    %556 = arith.addf %554, %555 : vector<1x128xf32>
    %557 = arith.mulf %523, %528 : vector<1x128xf32>
    %558 = arith.addf %556, %557 : vector<1x128xf32>
    %559 = arith.mulf %513, %503 : vector<1x128xf32>
    %560 = arith.mulf %518, %518 : vector<1x128xf32>
    %561 = arith.addf %559, %560 : vector<1x128xf32>
    %562 = arith.mulf %523, %533 : vector<1x128xf32>
    %563 = arith.addf %561, %562 : vector<1x128xf32>
    %564 = arith.mulf %513, %508 : vector<1x128xf32>
    %565 = arith.mulf %518, %523 : vector<1x128xf32>
    %566 = arith.addf %564, %565 : vector<1x128xf32>
    %567 = arith.mulf %523, %538 : vector<1x128xf32>
    %568 = arith.addf %566, %567 : vector<1x128xf32>
    %569 = arith.mulf %528, %498 : vector<1x128xf32>
    %570 = arith.mulf %533, %513 : vector<1x128xf32>
    %571 = arith.addf %569, %570 : vector<1x128xf32>
    %572 = arith.mulf %538, %528 : vector<1x128xf32>
    %573 = arith.addf %571, %572 : vector<1x128xf32>
    %574 = arith.mulf %528, %503 : vector<1x128xf32>
    %575 = arith.mulf %533, %518 : vector<1x128xf32>
    %576 = arith.addf %574, %575 : vector<1x128xf32>
    %577 = arith.mulf %538, %533 : vector<1x128xf32>
    %578 = arith.addf %576, %577 : vector<1x128xf32>
    %579 = arith.mulf %528, %508 : vector<1x128xf32>
    %580 = arith.mulf %533, %523 : vector<1x128xf32>
    %581 = arith.addf %579, %580 : vector<1x128xf32>
    %582 = arith.mulf %538, %538 : vector<1x128xf32>
    %583 = arith.addf %581, %582 : vector<1x128xf32>
    %584 = arith.mulf %543, %543 : vector<1x128xf32>
    %585 = arith.mulf %548, %558 : vector<1x128xf32>
    %586 = arith.addf %584, %585 : vector<1x128xf32>
    %587 = arith.mulf %553, %573 : vector<1x128xf32>
    %588 = arith.addf %586, %587 : vector<1x128xf32>
    %589 = arith.mulf %543, %548 : vector<1x128xf32>
    %590 = arith.mulf %548, %563 : vector<1x128xf32>
    %591 = arith.addf %589, %590 : vector<1x128xf32>
    %592 = arith.mulf %553, %578 : vector<1x128xf32>
    %593 = arith.addf %591, %592 : vector<1x128xf32>
    %594 = arith.mulf %543, %553 : vector<1x128xf32>
    %595 = arith.mulf %548, %568 : vector<1x128xf32>
    %596 = arith.addf %594, %595 : vector<1x128xf32>
    %597 = arith.mulf %553, %583 : vector<1x128xf32>
    %598 = arith.addf %596, %597 : vector<1x128xf32>
    %599 = arith.mulf %558, %543 : vector<1x128xf32>
    %600 = arith.mulf %563, %558 : vector<1x128xf32>
    %601 = arith.addf %599, %600 : vector<1x128xf32>
    %602 = arith.mulf %568, %573 : vector<1x128xf32>
    %603 = arith.addf %601, %602 : vector<1x128xf32>
    %604 = arith.mulf %558, %548 : vector<1x128xf32>
    %605 = arith.mulf %563, %563 : vector<1x128xf32>
    %606 = arith.addf %604, %605 : vector<1x128xf32>
    %607 = arith.mulf %568, %578 : vector<1x128xf32>
    %608 = arith.addf %606, %607 : vector<1x128xf32>
    %609 = arith.mulf %558, %553 : vector<1x128xf32>
    %610 = arith.mulf %563, %568 : vector<1x128xf32>
    %611 = arith.addf %609, %610 : vector<1x128xf32>
    %612 = arith.mulf %568, %583 : vector<1x128xf32>
    %613 = arith.addf %611, %612 : vector<1x128xf32>
    %614 = arith.mulf %573, %543 : vector<1x128xf32>
    %615 = arith.mulf %578, %558 : vector<1x128xf32>
    %616 = arith.addf %614, %615 : vector<1x128xf32>
    %617 = arith.mulf %583, %573 : vector<1x128xf32>
    %618 = arith.addf %616, %617 : vector<1x128xf32>
    %619 = arith.mulf %573, %548 : vector<1x128xf32>
    %620 = arith.mulf %578, %563 : vector<1x128xf32>
    %621 = arith.addf %619, %620 : vector<1x128xf32>
    %622 = arith.mulf %583, %578 : vector<1x128xf32>
    %623 = arith.addf %621, %622 : vector<1x128xf32>
    %624 = arith.mulf %573, %553 : vector<1x128xf32>
    %625 = arith.mulf %578, %568 : vector<1x128xf32>
    %626 = arith.addf %624, %625 : vector<1x128xf32>
    %627 = arith.mulf %583, %583 : vector<1x128xf32>
    %628 = arith.addf %626, %627 : vector<1x128xf32>
    %629 = arith.mulf %588, %588 : vector<1x128xf32>
    %630 = arith.mulf %593, %603 : vector<1x128xf32>
    %631 = arith.addf %629, %630 : vector<1x128xf32>
    %632 = arith.mulf %598, %618 : vector<1x128xf32>
    %633 = arith.addf %631, %632 : vector<1x128xf32>
    %634 = arith.mulf %588, %593 : vector<1x128xf32>
    %635 = arith.mulf %593, %608 : vector<1x128xf32>
    %636 = arith.addf %634, %635 : vector<1x128xf32>
    %637 = arith.mulf %598, %623 : vector<1x128xf32>
    %638 = arith.addf %636, %637 : vector<1x128xf32>
    %639 = arith.mulf %588, %598 : vector<1x128xf32>
    %640 = arith.mulf %593, %613 : vector<1x128xf32>
    %641 = arith.addf %639, %640 : vector<1x128xf32>
    %642 = arith.mulf %598, %628 : vector<1x128xf32>
    %643 = arith.addf %641, %642 : vector<1x128xf32>
    %644 = arith.mulf %603, %588 : vector<1x128xf32>
    %645 = arith.mulf %608, %603 : vector<1x128xf32>
    %646 = arith.addf %644, %645 : vector<1x128xf32>
    %647 = arith.mulf %613, %618 : vector<1x128xf32>
    %648 = arith.addf %646, %647 : vector<1x128xf32>
    %649 = arith.mulf %603, %593 : vector<1x128xf32>
    %650 = arith.mulf %608, %608 : vector<1x128xf32>
    %651 = arith.addf %649, %650 : vector<1x128xf32>
    %652 = arith.mulf %613, %623 : vector<1x128xf32>
    %653 = arith.addf %651, %652 : vector<1x128xf32>
    %654 = arith.mulf %603, %598 : vector<1x128xf32>
    %655 = arith.mulf %608, %613 : vector<1x128xf32>
    %656 = arith.addf %654, %655 : vector<1x128xf32>
    %657 = arith.mulf %613, %628 : vector<1x128xf32>
    %658 = arith.addf %656, %657 : vector<1x128xf32>
    %659 = arith.mulf %618, %588 : vector<1x128xf32>
    %660 = arith.mulf %623, %603 : vector<1x128xf32>
    %661 = arith.addf %659, %660 : vector<1x128xf32>
    %662 = arith.mulf %628, %618 : vector<1x128xf32>
    %663 = arith.addf %661, %662 : vector<1x128xf32>
    %664 = arith.mulf %618, %593 : vector<1x128xf32>
    %665 = arith.mulf %623, %608 : vector<1x128xf32>
    %666 = arith.addf %664, %665 : vector<1x128xf32>
    %667 = arith.mulf %628, %623 : vector<1x128xf32>
    %668 = arith.addf %666, %667 : vector<1x128xf32>
    %669 = arith.mulf %618, %598 : vector<1x128xf32>
    %670 = arith.mulf %623, %613 : vector<1x128xf32>
    %671 = arith.addf %669, %670 : vector<1x128xf32>
    %672 = arith.mulf %628, %628 : vector<1x128xf32>
    %673 = arith.addf %671, %672 : vector<1x128xf32>
    %674 = arith.mulf %633, %633 : vector<1x128xf32>
    %675 = arith.mulf %638, %648 : vector<1x128xf32>
    %676 = arith.addf %674, %675 : vector<1x128xf32>
    %677 = arith.mulf %643, %663 : vector<1x128xf32>
    %678 = arith.addf %676, %677 : vector<1x128xf32>
    %679 = arith.mulf %633, %638 : vector<1x128xf32>
    %680 = arith.mulf %638, %653 : vector<1x128xf32>
    %681 = arith.addf %679, %680 : vector<1x128xf32>
    %682 = arith.mulf %643, %668 : vector<1x128xf32>
    %683 = arith.addf %681, %682 : vector<1x128xf32>
    %684 = arith.mulf %633, %643 : vector<1x128xf32>
    %685 = arith.mulf %638, %658 : vector<1x128xf32>
    %686 = arith.addf %684, %685 : vector<1x128xf32>
    %687 = arith.mulf %643, %673 : vector<1x128xf32>
    %688 = arith.addf %686, %687 : vector<1x128xf32>
    %689 = arith.mulf %648, %633 : vector<1x128xf32>
    %690 = arith.mulf %653, %648 : vector<1x128xf32>
    %691 = arith.addf %689, %690 : vector<1x128xf32>
    %692 = arith.mulf %658, %663 : vector<1x128xf32>
    %693 = arith.addf %691, %692 : vector<1x128xf32>
    %694 = arith.mulf %648, %638 : vector<1x128xf32>
    %695 = arith.mulf %653, %653 : vector<1x128xf32>
    %696 = arith.addf %694, %695 : vector<1x128xf32>
    %697 = arith.mulf %658, %668 : vector<1x128xf32>
    %698 = arith.addf %696, %697 : vector<1x128xf32>
    %699 = arith.mulf %648, %643 : vector<1x128xf32>
    %700 = arith.mulf %653, %658 : vector<1x128xf32>
    %701 = arith.addf %699, %700 : vector<1x128xf32>
    %702 = arith.mulf %658, %673 : vector<1x128xf32>
    %703 = arith.addf %701, %702 : vector<1x128xf32>
    %704 = arith.mulf %663, %633 : vector<1x128xf32>
    %705 = arith.mulf %668, %648 : vector<1x128xf32>
    %706 = arith.addf %704, %705 : vector<1x128xf32>
    %707 = arith.mulf %673, %663 : vector<1x128xf32>
    %708 = arith.addf %706, %707 : vector<1x128xf32>
    %709 = arith.mulf %663, %638 : vector<1x128xf32>
    %710 = arith.mulf %668, %653 : vector<1x128xf32>
    %711 = arith.addf %709, %710 : vector<1x128xf32>
    %712 = arith.mulf %673, %668 : vector<1x128xf32>
    %713 = arith.addf %711, %712 : vector<1x128xf32>
    %714 = arith.mulf %663, %643 : vector<1x128xf32>
    %715 = arith.mulf %668, %658 : vector<1x128xf32>
    %716 = arith.addf %714, %715 : vector<1x128xf32>
    %717 = arith.mulf %673, %673 : vector<1x128xf32>
    %718 = arith.addf %716, %717 : vector<1x128xf32>
    %719 = tpu.reciprocal %718 {approx = true} : vector<1x128xf32> -> vector<1x128xf32>
    %720 = arith.mulf %718, %719 : vector<1x128xf32>
    %cst_117 = arith.constant 2.000000e+00 : f32
    %721 = vector.broadcast %cst_117 : f32 to vector<1x128xf32>
    %722 = arith.subf %721, %720 : vector<1x128xf32>
    %723 = arith.mulf %719, %722 : vector<1x128xf32>
    %724 = arith.mulf %678, %723 : vector<1x128xf32>
    %c0_118 = arith.constant 0 : index
    %c0_119 = arith.constant 0 : index
    %c0_120 = arith.constant 0 : index
    %725 = vector.load %arg2[%c0_118, %c0_119, %c0_120] : memref<9x1x128xf32, #tpu.memory_space<vmem>>, vector<1x1x128xf32>
    %726 = vector.shape_cast %725 : vector<1x1x128xf32> to vector<1x128xf32>
    %727 = vector.shape_cast %724 : vector<1x128xf32> to vector<1x1x128xf32>
    tpu.vector_store %arg2[%c0_118, %c0_119, %c0_120], %727 {strides = array<i32>} : memref<9x1x128xf32, #tpu.memory_space<vmem>>, vector<1x1x128xf32>,
    %728 = arith.mulf %683, %723 : vector<1x128xf32>
    %c1_121 = arith.constant 1 : index
    %c0_122 = arith.constant 0 : index
    %c0_123 = arith.constant 0 : index
    %729 = vector.load %arg2[%c1_121, %c0_122, %c0_123] : memref<9x1x128xf32, #tpu.memory_space<vmem>>, vector<1x1x128xf32>
    %730 = vector.shape_cast %729 : vector<1x1x128xf32> to vector<1x128xf32>
    %731 = vector.shape_cast %728 : vector<1x128xf32> to vector<1x1x128xf32>
    tpu.vector_store %arg2[%c1_121, %c0_122, %c0_123], %731 {strides = array<i32>} : memref<9x1x128xf32, #tpu.memory_space<vmem>>, vector<1x1x128xf32>,
    %732 = arith.mulf %688, %723 : vector<1x128xf32>
    %c2_124 = arith.constant 2 : index
    %c0_125 = arith.constant 0 : index
    %c0_126 = arith.constant 0 : index
    %733 = vector.load %arg2[%c2_124, %c0_125, %c0_126] : memref<9x1x128xf32, #tpu.memory_space<vmem>>, vector<1x1x128xf32>
    %734 = vector.shape_cast %733 : vector<1x1x128xf32> to vector<1x128xf32>
    %735 = vector.shape_cast %732 : vector<1x128xf32> to vector<1x1x128xf32>
    tpu.vector_store %arg2[%c2_124, %c0_125, %c0_126], %735 {strides = array<i32>} : memref<9x1x128xf32, #tpu.memory_space<vmem>>, vector<1x1x128xf32>,
    %736 = arith.mulf %693, %723 : vector<1x128xf32>
    %c3_127 = arith.constant 3 : index
    %c0_128 = arith.constant 0 : index
    %c0_129 = arith.constant 0 : index
    %737 = vector.load %arg2[%c3_127, %c0_128, %c0_129] : memref<9x1x128xf32, #tpu.memory_space<vmem>>, vector<1x1x128xf32>
    %738 = vector.shape_cast %737 : vector<1x1x128xf32> to vector<1x128xf32>
    %739 = vector.shape_cast %736 : vector<1x128xf32> to vector<1x1x128xf32>
    tpu.vector_store %arg2[%c3_127, %c0_128, %c0_129], %739 {strides = array<i32>} : memref<9x1x128xf32, #tpu.memory_space<vmem>>, vector<1x1x128xf32>,
    %740 = arith.mulf %698, %723 : vector<1x128xf32>
    %c4_130 = arith.constant 4 : index
    %c0_131 = arith.constant 0 : index
    %c0_132 = arith.constant 0 : index
    %741 = vector.load %arg2[%c4_130, %c0_131, %c0_132] : memref<9x1x128xf32, #tpu.memory_space<vmem>>, vector<1x1x128xf32>
    %742 = vector.shape_cast %741 : vector<1x1x128xf32> to vector<1x128xf32>
    %743 = vector.shape_cast %740 : vector<1x128xf32> to vector<1x1x128xf32>
    tpu.vector_store %arg2[%c4_130, %c0_131, %c0_132], %743 {strides = array<i32>} : memref<9x1x128xf32, #tpu.memory_space<vmem>>, vector<1x1x128xf32>,
    %744 = arith.mulf %703, %723 : vector<1x128xf32>
    %c5_133 = arith.constant 5 : index
    %c0_134 = arith.constant 0 : index
    %c0_135 = arith.constant 0 : index
    %745 = vector.load %arg2[%c5_133, %c0_134, %c0_135] : memref<9x1x128xf32, #tpu.memory_space<vmem>>, vector<1x1x128xf32>
    %746 = vector.shape_cast %745 : vector<1x1x128xf32> to vector<1x128xf32>
    %747 = vector.shape_cast %744 : vector<1x128xf32> to vector<1x1x128xf32>
    tpu.vector_store %arg2[%c5_133, %c0_134, %c0_135], %747 {strides = array<i32>} : memref<9x1x128xf32, #tpu.memory_space<vmem>>, vector<1x1x128xf32>,
    %748 = arith.mulf %708, %723 : vector<1x128xf32>
    %c6_136 = arith.constant 6 : index
    %c0_137 = arith.constant 0 : index
    %c0_138 = arith.constant 0 : index
    %749 = vector.load %arg2[%c6_136, %c0_137, %c0_138] : memref<9x1x128xf32, #tpu.memory_space<vmem>>, vector<1x1x128xf32>
    %750 = vector.shape_cast %749 : vector<1x1x128xf32> to vector<1x128xf32>
    %751 = vector.shape_cast %748 : vector<1x128xf32> to vector<1x1x128xf32>
    tpu.vector_store %arg2[%c6_136, %c0_137, %c0_138], %751 {strides = array<i32>} : memref<9x1x128xf32, #tpu.memory_space<vmem>>, vector<1x1x128xf32>,
    %752 = arith.mulf %713, %723 : vector<1x128xf32>
    %c7_139 = arith.constant 7 : index
    %c0_140 = arith.constant 0 : index
    %c0_141 = arith.constant 0 : index
    %753 = vector.load %arg2[%c7_139, %c0_140, %c0_141] : memref<9x1x128xf32, #tpu.memory_space<vmem>>, vector<1x1x128xf32>
    %754 = vector.shape_cast %753 : vector<1x1x128xf32> to vector<1x128xf32>
    %755 = vector.shape_cast %752 : vector<1x128xf32> to vector<1x1x128xf32>
    tpu.vector_store %arg2[%c7_139, %c0_140, %c0_141], %755 {strides = array<i32>} : memref<9x1x128xf32, #tpu.memory_space<vmem>>, vector<1x1x128xf32>,
    %756 = arith.mulf %718, %723 : vector<1x128xf32>
    %c8 = arith.constant 8 : index
    %c0_142 = arith.constant 0 : index
    %c0_143 = arith.constant 0 : index
    %757 = vector.load %arg2[%c8, %c0_142, %c0_143] : memref<9x1x128xf32, #tpu.memory_space<vmem>>, vector<1x1x128xf32>
    %758 = vector.shape_cast %757 : vector<1x1x128xf32> to vector<1x128xf32>
    %759 = vector.shape_cast %756 : vector<1x128xf32> to vector<1x1x128xf32>
    tpu.vector_store %arg2[%c8, %c0_142, %c0_143], %759 {strides = array<i32>} : memref<9x1x128xf32, #tpu.memory_space<vmem>>, vector<1x1x128xf32>,
    return
  }
  func.func @transform_0(%arg0: i32) -> (i32, i32, i32) {
    %c0_i32 = arith.constant 0 : i32
    %c0_i32_0 = arith.constant 0 : i32
    %c0_i32_1 = arith.constant 0 : i32
    return %c0_i32, %arg0, %c0_i32_0 : i32, i32, i32
  }
  func.func @transform_1(%arg0: i32) -> (i32, i32, i32) {
    %c0_i32 = arith.constant 0 : i32
    %c0_i32_0 = arith.constant 0 : i32
    %c0_i32_1 = arith.constant 0 : i32
    return %c0_i32, %arg0, %c0_i32_0 : i32, i32, i32
  }
}

</mosaic_0001>

<llo_original>
// kernel: tpu_custom_call.1
$region0: #{tpu_custom_call.1}
  #allocation0 [shape = 'u32[]', space=smem, size = 0x4, offset = 0x4, fixed_abs, tag = 'smem constant byte address 0x4 - core index']
  #allocation1 [shape = 'u32[72,128]{1,0:T(1,128)}', space=vmem, size = 0x9000, scoped, tag = 'internal scratch']
  %s0 = inlined_call_operand.hbm [shape: f32[8,1,128], index: 0, kind: input, shape index: {}]
  %s1 = inlined_call_operand.hbm [shape: f32[9,1,128], index: 1, kind: output, shape index: {}]
  %s2 = sld [smem:[#allocation0]]
  $region18: #{tpu_custom_call.1} parent=0
    _
  %s4 = ssub.s32 1, %s2
  %s5 = scalar_select 0, %s4, %s2
  $region1: #{tpu_custom_call.1} parent=0
    #allocation2 [shape = 'u8[4096]{0}', space=vmem, size = 0x1000, scoped, tag = 'input window, operand 0, single buffered']
    #allocation3 [shape = 's32[1]{0}', space=sflag, size = 0x4, scoped, tag = 'scoped memory for tpu_custom_call.1']
    #allocation4 [shape = 's32[1]{0}', space=sflag, size = 0x4, scoped, tag = 'scoped memory for tpu_custom_call.1']
    #allocation5 [shape = 'u8[4608]{0}', space=vmem, size = 0x1400, scoped, tag = 'output window, operand 0, single buffered']
    %6 = vsyncpa [#allocation3], 0
    %7 = vsyncpa [#allocation4], 0
    // Predicated region
    $region2: #{tpu_custom_call.1} parent=1 // pred_check
      _
    $region3: #{tpu_custom_call.1} parent=1 // pred_check_branch
      %9 = sbr.rel (0) target = $region5
    $region4: #{tpu_custom_call.1} parent=1 // pred_region
      %11 = vsyncadd [#allocation3], 0
      %s12 = sshll.u32 %s0, 4
      %s13 = int_to_ptr.hbm [resolvable:$true] %s12
      %s14 = sshll.u32 [#allocation2], 4
      %s15 = int_to_ptr.vmem [resolvable:$true] %s14
      %20 = dma.hbm_to_vmem [thread:$0]  %s13, 128, %s15, [#allocation3], 16, 16, 1
    $region5: #{tpu_custom_call.1} parent=1 // pred_fallthru
      _
    // Predicated region
    $region6: #{tpu_custom_call.1} parent=1 // pred_check
      _
    $region7: #{tpu_custom_call.1} parent=1 // pred_check_branch
      %22 = sbr.rel (0) target = $region9
    $region8: #{tpu_custom_call.1} parent=1 // pred_region
      %24 = dma.done [#allocation3], 128
    $region9: #{tpu_custom_call.1} parent=1 // pred_fallthru
      _
    %v25 = vld [vmem:[#allocation2] sm:$0x1]
    %s26 = scalar_lea.vmem [#allocation2], 1
    %v27 = vld [vmem:[%s26] sm:$0x1]
    %s28 = scalar_lea.vmem [#allocation2], 2
    %v29 = vld [vmem:[%s28] sm:$0x1]
    %s30 = scalar_lea.vmem [#allocation2], 3
    %v31 = vld [vmem:[%s30] sm:$0x1]
    %s32 = scalar_lea.vmem [#allocation2], 4
    %v33 = vld [vmem:[%s32] sm:$0x1]
    %s34 = scalar_lea.vmem [#allocation2], 5
    %v35 = vld [vmem:[%s34] sm:$0x1]
    %s36 = scalar_lea.vmem [#allocation2], 6
    %v37 = vld [vmem:[%s36] sm:$0x1]
    %s38 = scalar_lea.vmem [#allocation2], 7
    %v39 = vld [vmem:[%s38] sm:$0x1]
    %v40 = vadd.f32 %v31, %v33
    %v41 = vsub.f32 %v35, %v29
    %v42 = vadd.f32 %v29, %v35
    %v43 = vsub.f32 %v31, %v33
    %v44 = vmul.f32 %v31, -2.0
    %v45 = vmul.f32 %v40, 0.03125
    %v46 = vmul.f32 %v41, 0.03125
    %v47 = vmul.f32 %v25, 0.03125
    %v48 = vmul.f32 %v42, 0.03125
    %v49 = vmul.f32 %v43, 0.03125
    %v50 = vmul.f32 %v27, 0.03125
    %v51 = vmul.f32 %v37, 0.03125
    %v52 = vmul.f32 %v39, 0.03125
    %v53 = vmul.f32 %v44, 0.03125
    %v54 = vmul.f32 %v45, 0.14285715
    %v55 = vmul.f32 %v46, 0.14285715
    %v56 = vmul.f32 %v47, 0.14285715
    %v57 = vmul.f32 %v48, 0.14285715
    %v58 = vmul.f32 %v49, 0.14285715
    %v59 = vmul.f32 %v50, 0.14285715
    %v60 = vmul.f32 %v51, 0.14285715
    %v61 = vmul.f32 %v52, 0.14285715
    %v62 = vmul.f32 %v53, 0.14285715
    %v63 = vadd.f32 %v54, 1.0
    %v64 = vadd.f32 %v58, 1.0
    %v65 = vadd.f32 %v62, 1.0
    %v66 = vmul.f32 %v45, %v63
    %v67 = vmul.f32 %v46, %v57
    %v68 = vadd.f32 %v66, %v67
    %v69 = vmul.f32 %v47, %v60
    %v70 = vadd.f32 %v68, %v69
    %v71 = vmul.f32 %v45, %v55
    %v72 = vmul.f32 %v46, %v64
    %v73 = vadd.f32 %v71, %v72
    %v74 = vmul.f32 %v47, %v61
    %v75 = vadd.f32 %v73, %v74
    %v76 = vmul.f32 %v45, %v56
    %v77 = vmul.f32 %v46, %v59
    %v78 = vadd.f32 %v76, %v77
    %v79 = vmul.f32 %v47, %v65
    %v80 = vadd.f32 %v78, %v79
    %v81 = vmul.f32 %v48, %v63
    %v82 = vmul.f32 %v49, %v57
    %v83 = vadd.f32 %v81, %v82
    %v84 = vmul.f32 %v50, %v60
    %v85 = vadd.f32 %v83, %v84
    %v86 = vmul.f32 %v48, %v55
    %v87 = vmul.f32 %v49, %v64
    %v88 = vadd.f32 %v86, %v87
    %v89 = vmul.f32 %v50, %v61
    %v90 = vadd.f32 %v88, %v89
    %v91 = vmul.f32 %v48, %v56
    %v92 = vmul.f32 %v49, %v59
    %v93 = vadd.f32 %v91, %v92
    %v94 = vmul.f32 %v50, %v65
    %v95 = vadd.f32 %v93, %v94
    %v96 = vmul.f32 %v51, %v63
    %v97 = vmul.f32 %v52, %v57
    %v98 = vadd.f32 %v96, %v97
    %v99 = vmul.f32 %v53, %v60
    %v100 = vadd.f32 %v98, %v99
    %v101 = vmul.f32 %v51, %v55
    %v102 = vmul.f32 %v52, %v64
    %v103 = vadd.f32 %v101, %v102
    %v104 = vmul.f32 %v53, %v61
    %v105 = vadd.f32 %v103, %v104
    %v106 = vmul.f32 %v51, %v56
    %v107 = vmul.f32 %v52, %v59
    %v108 = vadd.f32 %v106, %v107
    %v109 = vmul.f32 %v53, %v65
    %v110 = vadd.f32 %v108, %v109
    %v111 = vmul.f32 %v70, 0.16666667
    %v112 = vmul.f32 %v75, 0.16666667
    %v113 = vmul.f32 %v80, 0.16666667
    %v114 = vmul.f32 %v85, 0.16666667
    %v115 = vmul.f32 %v90, 0.16666667
    %v116 = vmul.f32 %v95, 0.16666667
    %v117 = vmul.f32 %v100, 0.16666667
    %v118 = vmul.f32 %v105, 0.16666667
    %v119 = vmul.f32 %v110, 0.16666667
    %v120 = vadd.f32 %v111, 1.0
    %v121 = vadd.f32 %v115, 1.0
    %v122 = vadd.f32 %v119, 1.0
    %v123 = vmul.f32 %v45, %v120
    %v124 = vmul.f32 %v46, %v114
    %v125 = vadd.f32 %v123, %v124
    %v126 = vmul.f32 %v47, %v117
    %v127 = vadd.f32 %v125, %v126
    %v128 = vmul.f32 %v45, %v112
    %v129 = vmul.f32 %v46, %v121
    %v130 = vadd.f32 %v128, %v129
    %v131 = vmul.f32 %v47, %v118
    %v132 = vadd.f32 %v130, %v131
    %v133 = vmul.f32 %v45, %v113
    %v134 = vmul.f32 %v46, %v116
    %v135 = vadd.f32 %v133, %v134
    %v136 = vmul.f32 %v47, %v122
    %v137 = vadd.f32 %v135, %v136
    %v138 = vmul.f32 %v48, %v120
    %v139 = vmul.f32 %v49, %v114
    %v140 = vadd.f32 %v138, %v139
    %v141 = vmul.f32 %v50, %v117
    %v142 = vadd.f32 %v140, %v141
    %v143 = vmul.f32 %v48, %v112
    %v144 = vmul.f32 %v49, %v121
    %v145 = vadd.f32 %v143, %v144
    %v146 = vmul.f32 %v50, %v118
    %v147 = vadd.f32 %v145, %v146
    %v148 = vmul.f32 %v48, %v113
    %v149 = vmul.f32 %v49, %v116
    %v150 = vadd.f32 %v148, %v149
    %v151 = vmul.f32 %v50, %v122
    %v152 = vadd.f32 %v150, %v151
    %v153 = vmul.f32 %v51, %v120
    %v154 = vmul.f32 %v52, %v114
    %v155 = vadd.f32 %v153, %v154
    %v156 = vmul.f32 %v53, %v117
    %v157 = vadd.f32 %v155, %v156
    %v158 = vmul.f32 %v51, %v112
    %v159 = vmul.f32 %v52, %v121
    %v160 = vadd.f32 %v158, %v159
    %v161 = vmul.f32 %v53, %v118
    %v162 = vadd.f32 %v160, %v161
    %v163 = vmul.f32 %v51, %v113
    %v164 = vmul.f32 %v52, %v116
    %v165 = vadd.f32 %v163, %v164
    %v166 = vmul.f32 %v53, %v122
    %v167 = vadd.f32 %v165, %v166
    %v168 = vmul.f32 %v127, 0.2
    %v169 = vmul.f32 %v132, 0.2
    %v170 = vmul.f32 %v137, 0.2
    %v171 = vmul.f32 %v142, 0.2
    %v172 = vmul.f32 %v147, 0.2
    %v173 = vmul.f32 %v152, 0.2
    %v174 = vmul.f32 %v157, 0.2
    %v175 = vmul.f32 %v162, 0.2
    %v176 = vmul.f32 %v167, 0.2
    %v177 = vadd.f32 %v168, 1.0
    %v178 = vadd.f32 %v172, 1.0
    %v179 = vadd.f32 %v176, 1.0
    %v180 = vmul.f32 %v45, %v177
    %v181 = vmul.f32 %v46, %v171
    %v182 = vadd.f32 %v180, %v181
    %v183 = vmul.f32 %v47, %v174
    %v184 = vadd.f32 %v182, %v183
    %v185 = vmul.f32 %v45, %v169
    %v186 = vmul.f32 %v46, %v178
    %v187 = vadd.f32 %v185, %v186
    %v188 = vmul.f32 %v47, %v175
    %v189 = vadd.f32 %v187, %v188
    %v190 = vmul.f32 %v45, %v170
    %v191 = vmul.f32 %v46, %v173
    %v192 = vadd.f32 %v190, %v191
    %v193 = vmul.f32 %v47, %v179
    %v194 = vadd.f32 %v192, %v193
    %v195 = vmul.f32 %v48, %v177
    %v196 = vmul.f32 %v49, %v171
    %v197 = vadd.f32 %v195, %v196
    %v198 = vmul.f32 %v50, %v174
    %v199 = vadd.f32 %v197, %v198
    %v200 = vmul.f32 %v48, %v169
    %v201 = vmul.f32 %v49, %v178
    %v202 = vadd.f32 %v200, %v201
    %v203 = vmul.f32 %v50, %v175
    %v204 = vadd.f32 %v202, %v203
    %v205 = vmul.f32 %v48, %v170
    %v206 = vmul.f32 %v49, %v173
    %v207 = vadd.f32 %v205, %v206
    %v208 = vmul.f32 %v50, %v179
    %v209 = vadd.f32 %v207, %v208
    %v210 = vmul.f32 %v51, %v177
    %v211 = vmul.f32 %v52, %v171
    %v212 = vadd.f32 %v210, %v211
    %v213 = vmul.f32 %v53, %v174
    %v214 = vadd.f32 %v212, %v213
    %v215 = vmul.f32 %v51, %v169
    %v216 = vmul.f32 %v52, %v178
    %v217 = vadd.f32 %v215, %v216
    %v218 = vmul.f32 %v53, %v175
    %v219 = vadd.f32 %v217, %v218
    %v220 = vmul.f32 %v51, %v170
    %v221 = vmul.f32 %v52, %v173
    %v222 = vadd.f32 %v220, %v221
    %v223 = vmul.f32 %v53, %v179
    %v224 = vadd.f32 %v222, %v223
    %v225 = vmul.f32 %v184, 0.25
    %v226 = vmul.f32 %v189, 0.25
    %v227 = vmul.f32 %v194, 0.25
    %v228 = vmul.f32 %v199, 0.25
    %v229 = vmul.f32 %v204, 0.25
    %v230 = vmul.f32 %v209, 0.25
    %v231 = vmul.f32 %v214, 0.25
    %v232 = vmul.f32 %v219, 0.25
    %v233 = vmul.f32 %v224, 0.25
    %v234 = vadd.f32 %v225, 1.0
    %v235 = vadd.f32 %v229, 1.0
    %v236 = vadd.f32 %v233, 1.0
    %v237 = vmul.f32 %v45, %v234
    %v238 = vmul.f32 %v46, %v228
    %v239 = vadd.f32 %v237, %v238
    %v240 = vmul.f32 %v47, %v231
    %v241 = vadd.f32 %v239, %v240
    %v242 = vmul.f32 %v45, %v226
    %v243 = vmul.f32 %v46, %v235
    %v244 = vadd.f32 %v242, %v243
    %v245 = vmul.f32 %v47, %v232
    %v246 = vadd.f32 %v244, %v245
    %v247 = vmul.f32 %v45, %v227
    %v248 = vmul.f32 %v46, %v230
    %v249 = vadd.f32 %v247, %v248
    %v250 = vmul.f32 %v47, %v236
    %v251 = vadd.f32 %v249, %v250
    %v252 = vmul.f32 %v48, %v234
    %v253 = vmul.f32 %v49, %v228
    %v254 = vadd.f32 %v252, %v253
    %v255 = vmul.f32 %v50, %v231
    %v256 = vadd.f32 %v254, %v255
    %v257 = vmul.f32 %v48, %v226
    %v258 = vmul.f32 %v49, %v235
    %v259 = vadd.f32 %v257, %v258
    %v260 = vmul.f32 %v50, %v232
    %v261 = vadd.f32 %v259, %v260
    %v262 = vmul.f32 %v48, %v227
    %v263 = vmul.f32 %v49, %v230
    %v264 = vadd.f32 %v262, %v263
    %v265 = vmul.f32 %v50, %v236
    %v266 = vadd.f32 %v264, %v265
    %v267 = vmul.f32 %v51, %v234
    %v268 = vmul.f32 %v52, %v228
    %v269 = vadd.f32 %v267, %v268
    %v270 = vmul.f32 %v53, %v231
    %v271 = vadd.f32 %v269, %v270
    %v272 = vmul.f32 %v51, %v226
    %v273 = vmul.f32 %v52, %v235
    %v274 = vadd.f32 %v272, %v273
    %v275 = vmul.f32 %v53, %v232
    %v276 = vadd.f32 %v274, %v275
    %v277 = vmul.f32 %v51, %v227
    %v278 = vmul.f32 %v52, %v230
    %v279 = vadd.f32 %v277, %v278
    %v280 = vmul.f32 %v53, %v236
    %v281 = vadd.f32 %v279, %v280
    %v282 = vmul.f32 %v241, 0.33333334
    %v283 = vmul.f32 %v246, 0.33333334
    %v284 = vmul.f32 %v251, 0.33333334
    %v285 = vmul.f32 %v256, 0.33333334
    %v286 = vmul.f32 %v261, 0.33333334
    %v287 = vmul.f32 %v266, 0.33333334
    %v288 = vmul.f32 %v271, 0.33333334
    %v289 = vmul.f32 %v276, 0.33333334
    %v290 = vmul.f32 %v281, 0.33333334
    %v291 = vadd.f32 %v282, 1.0
    %v292 = vadd.f32 %v286, 1.0
    %v293 = vadd.f32 %v290, 1.0
    %v294 = vmul.f32 %v45, %v291
    %v295 = vmul.f32 %v46, %v285
    %v296 = vadd.f32 %v294, %v295
    %v297 = vmul.f32 %v47, %v288
    %v298 = vadd.f32 %v296, %v297
    %v299 = vmul.f32 %v45, %v283
    %v300 = vmul.f32 %v46, %v292
    %v301 = vadd.f32 %v299, %v300
    %v302 = vmul.f32 %v47, %v289
    %v303 = vadd.f32 %v301, %v302
    %v304 = vmul.f32 %v45, %v284
    %v305 = vmul.f32 %v46, %v287
    %v306 = vadd.f32 %v304, %v305
    %v307 = vmul.f32 %v47, %v293
    %v308 = vadd.f32 %v306, %v307
    %v309 = vmul.f32 %v48, %v291
    %v310 = vmul.f32 %v49, %v285
    %v311 = vadd.f32 %v309, %v310
    %v312 = vmul.f32 %v50, %v288
    %v313 = vadd.f32 %v311, %v312
    %v314 = vmul.f32 %v48, %v283
    %v315 = vmul.f32 %v49, %v292
    %v316 = vadd.f32 %v314, %v315
    %v317 = vmul.f32 %v50, %v289
    %v318 = vadd.f32 %v316, %v317
    %v319 = vmul.f32 %v48, %v284
    %v320 = vmul.f32 %v49, %v287
    %v321 = vadd.f32 %v319, %v320
    %v322 = vmul.f32 %v50, %v293
    %v323 = vadd.f32 %v321, %v322
    %v324 = vmul.f32 %v51, %v291
    %v325 = vmul.f32 %v52, %v285
    %v326 = vadd.f32 %v324, %v325
    %v327 = vmul.f32 %v53, %v288
    %v328 = vadd.f32 %v326, %v327
    %v329 = vmul.f32 %v51, %v283
    %v330 = vmul.f32 %v52, %v292
    %v331 = vadd.f32 %v329, %v330
    %v332 = vmul.f32 %v53, %v289
    %v333 = vadd.f32 %v331, %v332
    %v334 = vmul.f32 %v51, %v284
    %v335 = vmul.f32 %v52, %v287
    %v336 = vadd.f32 %v334, %v335
    %v337 = vmul.f32 %v53, %v293
    %v338 = vadd.f32 %v336, %v337
    %v339 = vmul.f32 %v298, 0.5
    %v340 = vmul.f32 %v303, 0.5
    %v341 = vmul.f32 %v308, 0.5
    %v342 = vmul.f32 %v313, 0.5
    %v343 = vmul.f32 %v318, 0.5
    %v344 = vmul.f32 %v323, 0.5
    %v345 = vmul.f32 %v328, 0.5
    %v346 = vmul.f32 %v333, 0.5
    %v347 = vmul.f32 %v338, 0.5
    %v348 = vadd.f32 %v339, 1.0
    %v349 = vadd.f32 %v343, 1.0
    %v350 = vadd.f32 %v347, 1.0
    %v351 = vmul.f32 %v45, %v348
    %v352 = vmul.f32 %v46, %v342
    %v353 = vadd.f32 %v351, %v352
    %v354 = vmul.f32 %v47, %v345
    %v355 = vadd.f32 %v353, %v354
    %v356 = vmul.f32 %v45, %v340
    %v357 = vmul.f32 %v46, %v349
    %v358 = vadd.f32 %v356, %v357
    %v359 = vmul.f32 %v47, %v346
    %v360 = vadd.f32 %v358, %v359
    %v361 = vmul.f32 %v45, %v341
    %v362 = vmul.f32 %v46, %v344
    %v363 = vadd.f32 %v361, %v362
    %v364 = vmul.f32 %v47, %v350
    %v365 = vadd.f32 %v363, %v364
    %v366 = vmul.f32 %v48, %v348
    %v367 = vmul.f32 %v49, %v342
    %v368 = vadd.f32 %v366, %v367
    %v369 = vmul.f32 %v50, %v345
    %v370 = vadd.f32 %v368, %v369
    %v371 = vmul.f32 %v48, %v340
    %v372 = vmul.f32 %v49, %v349
    %v373 = vadd.f32 %v371, %v372
    %v374 = vmul.f32 %v50, %v346
    %v375 = vadd.f32 %v373, %v374
    %v376 = vmul.f32 %v48, %v341
    %v377 = vmul.f32 %v49, %v344
    %v378 = vadd.f32 %v376, %v377
    %v379 = vmul.f32 %v50, %v350
    %v380 = vadd.f32 %v378, %v379
    %v381 = vmul.f32 %v51, %v348
    %v382 = vmul.f32 %v52, %v342
    %v383 = vadd.f32 %v381, %v382
    %v384 = vmul.f32 %v53, %v345
    %v385 = vadd.f32 %v383, %v384
    %v386 = vmul.f32 %v51, %v340
    %v387 = vmul.f32 %v52, %v349
    %v388 = vadd.f32 %v386, %v387
    %v389 = vmul.f32 %v53, %v346
    %v390 = vadd.f32 %v388, %v389
    %v391 = vmul.f32 %v51, %v341
    %v392 = vmul.f32 %v52, %v344
    %v393 = vadd.f32 %v391, %v392
    %v394 = vmul.f32 %v53, %v350
    %v395 = vadd.f32 %v393, %v394
    %v396 = vadd.f32 %v355, 1.0
    %v397 = vadd.f32 %v375, 1.0
    %v398 = vadd.f32 %v395, 1.0
    %v399 = vmul.f32 %v396, %v396
    %v400 = vmul.f32 %v360, %v370
    %v401 = vadd.f32 %v399, %v400
    %v402 = vmul.f32 %v365, %v385
    %v403 = vadd.f32 %v401, %v402
    %v404 = vmul.f32 %v396, %v360
    %v405 = vmul.f32 %v360, %v397
    %v406 = vadd.f32 %v404, %v405
    %v407 = vmul.f32 %v365, %v390
    %v408 = vadd.f32 %v406, %v407
    %v409 = vmul.f32 %v396, %v365
    %v410 = vmul.f32 %v360, %v380
    %v411 = vadd.f32 %v409, %v410
    %v412 = vmul.f32 %v365, %v398
    %v413 = vadd.f32 %v411, %v412
    %v414 = vmul.f32 %v370, %v396
    %v415 = vmul.f32 %v397, %v370
    %v416 = vadd.f32 %v414, %v415
    %v417 = vmul.f32 %v380, %v385
    %v418 = vadd.f32 %v416, %v417
    %v419 = vmul.f32 %v397, %v397
    %v420 = vadd.f32 %v400, %v419
    %v421 = vmul.f32 %v380, %v390
    %v422 = vadd.f32 %v420, %v421
    %v423 = vmul.f32 %v370, %v365
    %v424 = vmul.f32 %v397, %v380
    %v425 = vadd.f32 %v423, %v424
    %v426 = vmul.f32 %v380, %v398
    %v427 = vadd.f32 %v425, %v426
    %v428 = vmul.f32 %v385, %v396
    %v429 = vmul.f32 %v390, %v370
    %v430 = vadd.f32 %v428, %v429
    %v431 = vmul.f32 %v398, %v385
    %v432 = vadd.f32 %v430, %v431
    %v433 = vmul.f32 %v385, %v360
    %v434 = vmul.f32 %v390, %v397
    %v435 = vadd.f32 %v433, %v434
    %v436 = vmul.f32 %v398, %v390
    %v437 = vadd.f32 %v435, %v436
    %v438 = vadd.f32 %v402, %v421
    %v439 = vmul.f32 %v398, %v398
    %v440 = vadd.f32 %v438, %v439
    %v441 = vmul.f32 %v403, %v403
    %v442 = vmul.f32 %v408, %v418
    %v443 = vadd.f32 %v441, %v442
    %v444 = vmul.f32 %v413, %v432
    %v445 = vadd.f32 %v443, %v444
    %v446 = vmul.f32 %v403, %v408
    %v447 = vmul.f32 %v408, %v422
    %v448 = vadd.f32 %v446, %v447
    %v449 = vmul.f32 %v413, %v437
    %v450 = vadd.f32 %v448, %v449
    %v451 = vmul.f32 %v403, %v413
    %v452 = vmul.f32 %v408, %v427
    %v453 = vadd.f32 %v451, %v452
    %v454 = vmul.f32 %v413, %v440
    %v455 = vadd.f32 %v453, %v454
    %v456 = vmul.f32 %v418, %v403
    %v457 = vmul.f32 %v422, %v418
    %v458 = vadd.f32 %v456, %v457
    %v459 = vmul.f32 %v427, %v432
    %v460 = vadd.f32 %v458, %v459
    %v461 = vmul.f32 %v422, %v422
    %v462 = vadd.f32 %v442, %v461
    %v463 = vmul.f32 %v427, %v437
    %v464 = vadd.f32 %v462, %v463
    %v465 = vmul.f32 %v418, %v413
    %v466 = vmul.f32 %v422, %v427
    %v467 = vadd.f32 %v465, %v466
    %v468 = vmul.f32 %v427, %v440
    %v469 = vadd.f32 %v467, %v468
    %v470 = vmul.f32 %v432, %v403
    %v471 = vmul.f32 %v437, %v418
    %v472 = vadd.f32 %v470, %v471
    %v473 = vmul.f32 %v440, %v432
    %v474 = vadd.f32 %v472, %v473
    %v475 = vmul.f32 %v432, %v408
    %v476 = vmul.f32 %v437, %v422
    %v477 = vadd.f32 %v475, %v476
    %v478 = vmul.f32 %v440, %v437
    %v479 = vadd.f32 %v477, %v478
    %v480 = vadd.f32 %v444, %v463
    %v481 = vmul.f32 %v440, %v440
    %v482 = vadd.f32 %v480, %v481
    %v483 = vmul.f32 %v445, %v445
    %v484 = vmul.f32 %v450, %v460
    %v485 = vadd.f32 %v483, %v484
    %v486 = vmul.f32 %v455, %v474
    %v487 = vadd.f32 %v485, %v486
    %v488 = vmul.f32 %v445, %v450
    %v489 = vmul.f32 %v450, %v464
    %v490 = vadd.f32 %v488, %v489
    %v491 = vmul.f32 %v455, %v479
    %v492 = vadd.f32 %v490, %v491
    %v493 = vmul.f32 %v445, %v455
    %v494 = vmul.f32 %v450, %v469
    %v495 = vadd.f32 %v493, %v494
    %v496 = vmul.f32 %v455, %v482
    %v497 = vadd.f32 %v495, %v496
    %v498 = vmul.f32 %v460, %v445
    %v499 = vmul.f32 %v464, %v460
    %v500 = vadd.f32 %v498, %v499
    %v501 = vmul.f32 %v469, %v474
    %v502 = vadd.f32 %v500, %v501
    %v503 = vmul.f32 %v464, %v464
    %v504 = vadd.f32 %v484, %v503
    %v505 = vmul.f32 %v469, %v479
    %v506 = vadd.f32 %v504, %v505
    %v507 = vmul.f32 %v460, %v455
    %v508 = vmul.f32 %v464, %v469
    %v509 = vadd.f32 %v507, %v508
    %v510 = vmul.f32 %v469, %v482
    %v511 = vadd.f32 %v509, %v510
    %v512 = vmul.f32 %v474, %v445
    %v513 = vmul.f32 %v479, %v460
    %v514 = vadd.f32 %v512, %v513
    %v515 = vmul.f32 %v482, %v474
    %v516 = vadd.f32 %v514, %v515
    %v517 = vmul.f32 %v474, %v450
    %v518 = vmul.f32 %v479, %v464
    %v519 = vadd.f32 %v517, %v518
    %v520 = vmul.f32 %v482, %v479
    %v521 = vadd.f32 %v519, %v520
    %v522 = vadd.f32 %v486, %v505
    %v523 = vmul.f32 %v482, %v482
    %v524 = vadd.f32 %v522, %v523
    %v525 = vmul.f32 %v487, %v487
    %v526 = vmul.f32 %v492, %v502
    %v527 = vadd.f32 %v525, %v526
    %v528 = vmul.f32 %v497, %v516
    %v529 = vadd.f32 %v527, %v528
    %v530 = vmul.f32 %v487, %v492
    %v531 = vmul.f32 %v492, %v506
    %v532 = vadd.f32 %v530, %v531
    %v533 = vmul.f32 %v497, %v521
    %v534 = vadd.f32 %v532, %v533
    %v535 = vmul.f32 %v487, %v497
    %v536 = vmul.f32 %v492, %v511
    %v537 = vadd.f32 %v535, %v536
    %v538 = vmul.f32 %v497, %v524
    %v539 = vadd.f32 %v537, %v538
    %v540 = vmul.f32 %v502, %v487
    %v541 = vmul.f32 %v506, %v502
    %v542 = vadd.f32 %v540, %v541
    %v543 = vmul.f32 %v511, %v516
    %v544 = vadd.f32 %v542, %v543
    %v545 = vmul.f32 %v506, %v506
    %v546 = vadd.f32 %v526, %v545
    %v547 = vmul.f32 %v511, %v521
    %v548 = vadd.f32 %v546, %v547
    %v549 = vmul.f32 %v502, %v497
    %v550 = vmul.f32 %v506, %v511
    %v551 = vadd.f32 %v549, %v550
    %v552 = vmul.f32 %v511, %v524
    %v553 = vadd.f32 %v551, %v552
    %v554 = vmul.f32 %v516, %v487
    %v555 = vmul.f32 %v521, %v502
    %v556 = vadd.f32 %v554, %v555
    %v557 = vmul.f32 %v524, %v516
    %v558 = vadd.f32 %v556, %v557
    %v559 = vmul.f32 %v516, %v492
    %v560 = vmul.f32 %v521, %v506
    %v561 = vadd.f32 %v559, %v560
    %v562 = vmul.f32 %v524, %v521
    %v563 = vadd.f32 %v561, %v562
    %v564 = vadd.f32 %v528, %v547
    %v565 = vmul.f32 %v524, %v524
    %v566 = vadd.f32 %v564, %v565
    %v567 = vmul.f32 %v529, %v529
    %v568 = vmul.f32 %v534, %v544
    %v569 = vadd.f32 %v567, %v568
    %v570 = vmul.f32 %v539, %v558
    %v571 = vadd.f32 %v569, %v570
    %v572 = vmul.f32 %v529, %v534
    %v573 = vmul.f32 %v534, %v548
    %v574 = vadd.f32 %v572, %v573
    %v575 = vmul.f32 %v539, %v563
    %v576 = vadd.f32 %v574, %v575
    %v577 = vmul.f32 %v529, %v539
    %v578 = vmul.f32 %v534, %v553
    %v579 = vadd.f32 %v577, %v578
    %v580 = vmul.f32 %v539, %v566
    %v581 = vadd.f32 %v579, %v580
    %v582 = vmul.f32 %v544, %v529
    %v583 = vmul.f32 %v548, %v544
    %v584 = vadd.f32 %v582, %v583
    %v585 = vmul.f32 %v553, %v558
    %v586 = vadd.f32 %v584, %v585
    %v587 = vmul.f32 %v548, %v548
    %v588 = vadd.f32 %v568, %v587
    %v589 = vmul.f32 %v553, %v563
    %v590 = vadd.f32 %v588, %v589
    %v591 = vmul.f32 %v544, %v539
    %v592 = vmul.f32 %v548, %v553
    %v593 = vadd.f32 %v591, %v592
    %v594 = vmul.f32 %v553, %v566
    %v595 = vadd.f32 %v593, %v594
    %v596 = vmul.f32 %v558, %v529
    %v597 = vmul.f32 %v563, %v544
    %v598 = vadd.f32 %v596, %v597
    %v599 = vmul.f32 %v566, %v558
    %v600 = vadd.f32 %v598, %v599
    %v601 = vmul.f32 %v558, %v534
    %v602 = vmul.f32 %v563, %v548
    %v603 = vadd.f32 %v601, %v602
    %v604 = vmul.f32 %v566, %v563
    %v605 = vadd.f32 %v603, %v604
    %v606 = vadd.f32 %v570, %v589
    %v607 = vmul.f32 %v566, %v566
    %v608 = vadd.f32 %v606, %v607
    %v609 = vrcp.pop %v608
    %v610 = vmul.f32 %v608, %v609
    %v611 = vsub.f32 2.0, %v610
    %v612 = vmul.f32 %v609, %v611
    %v613 = vmul.f32 %v571, %v612
    %614 = vst [vmem:[#allocation5] sm:$0x1] %v613
    %v615 = vmul.f32 %v576, %v612
    %s616 = scalar_lea.vmem [#allocation5], 1
    %617 = vst [vmem:[%s616] sm:$0x1] %v615
    %v618 = vmul.f32 %v581, %v612
    %s619 = scalar_lea.vmem [#allocation5], 2
    %620 = vst [vmem:[%s619] sm:$0x1] %v618
    %v621 = vmul.f32 %v586, %v612
    %s622 = scalar_lea.vmem [#allocation5], 3
    %623 = vst [vmem:[%s622] sm:$0x1] %v621
    %v624 = vmul.f32 %v590, %v612
    %s625 = scalar_lea.vmem [#allocation5], 4
    %626 = vst [vmem:[%s625] sm:$0x1] %v624
    %v627 = vmul.f32 %v595, %v612
    %s628 = scalar_lea.vmem [#allocation5], 5
    %629 = vst [vmem:[%s628] sm:$0x1] %v627
    %v630 = vmul.f32 %v600, %v612
    %s631 = scalar_lea.vmem [#allocation5], 6
    %632 = vst [vmem:[%s631] sm:$0x1] %v630
    %v633 = vmul.f32 %v605, %v612
    %s634 = scalar_lea.vmem [#allocation5], 7
    %635 = vst [vmem:[%s634] sm:$0x1] %v633
    %v636 = vmul.f32 %v608, %v612
    %s637 = scalar_lea.vmem [#allocation5], 8
    %638 = vst [vmem:[%s637] sm:$0x1] %v636
    // Predicated region
    $region10: #{tpu_custom_call.1} parent=1 // pred_check
      _
    $region11: #{tpu_custom_call.1} parent=1 // pred_check_branch
      %640 = sbr.rel (0) target = $region13
    $region12: #{tpu_custom_call.1} parent=1 // pred_region
      %642 = vsyncadd [#allocation4], 0
      %s643 = sshll.u32 [#allocation5], 4
      %s644 = int_to_ptr.vmem [resolvable:$true] %s643
      %s645 = sshll.u32 %s1, 4
      %s646 = int_to_ptr.hbm [resolvable:$true] %s645
      %651 = dma.vmem_to_hbm [thread:$0]  %s644, 144, %s646, [#allocation4], 16, 16, 1
    $region13: #{tpu_custom_call.1} parent=1 // pred_fallthru
      _
    // Predicated region
    $region14: #{tpu_custom_call.1} parent=1 // pred_check
      _
    $region15: #{tpu_custom_call.1} parent=1 // pred_check_branch
      %653 = sbr.rel (0) target = $region17
    $region16: #{tpu_custom_call.1} parent=1 // pred_region
      %655 = dma.done [#allocation4], 144
    $region17: #{tpu_custom_call.1} parent=1 // pred_fallthru
      _
    %656 = vsyncpa [#allocation3], 1
    %657 = vsyncpa [#allocation4], 1

</llo_original>
